<compile_context>
chip_gen: v7x
topology: tpu7x:2x2x1
jax: 0.10.0
libtpu: 0.0.40
codegen_flags: <defaults>
</compile_context>

<pallas_src>
import functools

import jax
import jax.numpy as jnp
from jax import lax
from jax.experimental import pallas as pl
from jax.experimental.pallas import tpu as pltpu


def attention_kernel(z1_ref, z2_ref, ws_ref, w1_ref, w2_ref,
                     bs_ref, b1_ref, b2_ref, o1_ref, o2_ref,
                     *, tb, n, hid, mxu_dtype):
    f32 = jnp.float32

    z1 = z1_ref[...]                                   # [tb*n, hid] (input dtype)
    z2 = z2_ref[...]
    z1m = z1.astype(mxu_dtype)
    z2m = z2.astype(mxu_dtype)

    ws_t = ws_ref[...]                                 # [n, n]     = Ws.T (mxu_dtype)
    w1_t = w1_ref[...]                                 # [hid, hid] = W1.T
    w2_t = w2_ref[...]                                 # [hid, hid] = W2.T
    # Hoisted bias loads / casts / broadcasts (not re-done per pair).
    bsb = jnp.broadcast_to(bs_ref[...].astype(f32), (hid, n))
    b1 = b1_ref[...].astype(f32)                       # [1, hid]
    b2 = b2_ref[...].astype(f32)

    # Tile-fused projections: one big MXU call each, shared weights across TB pairs.
    a = jnp.dot(z1m, w1_t, preferred_element_type=f32) + b1     # [tb*n, hid] f32
    b = jnp.dot(z2m, w2_t, preferred_element_type=f32) + b2     # [tb*n, hid] f32
    a_m = a.astype(mxu_dtype)                          # hoisted casts, reused per pair
    b_m = b.astype(mxu_dtype)

    dn_lt = (((0,), (0,)), ((), ()))    # x.T @ y   (no materialized transpose)
    dn_rt = (((1,), (1,)), ((), ()))    # x @ y.T   (no materialized transpose)

    def softmax_last(h):                # softmax over dim=1 (hid), in f32
        m = jnp.max(h, axis=-1, keepdims=True)
        e = jnp.exp(h - m)
        return e * pl.reciprocal(jnp.sum(e, axis=-1, keepdims=True), approx=True)

    # Per-pair math (C is pair specific) -- short, fully unrolled loop.
    for t in range(tb):
        r = slice(t * n, (t + 1) * n)
        z1t_m, z2t_m = z1m[r], z2m[r]                          # [n, hid]

        # sim = z1.T @ Ws.T + bs                               -> [hid, n]
        sim = lax.dot_general(z1t_m, ws_t, dn_lt,
                              preferred_element_type=f32) + bsb
        # C = tanh(sim @ z2)                                   -> [hid, hid]
        c_m = jnp.tanh(jnp.dot(sim.astype(mxu_dtype), z2t_m,
                               preferred_element_type=f32)).astype(mxu_dtype)

        # h1 = tanh(a + b @ C.T) ; h2 = tanh(a @ C + b)        -> [n, hid]
        h1 = jnp.tanh(a[r] + lax.dot_general(b_m[r], c_m, dn_rt,
                                             preferred_element_type=f32))
        h2 = jnp.tanh(jnp.dot(a_m[r], c_m, preferred_element_type=f32) + b[r])

        o1_ref[r, :] = (softmax_last(h1) * z1[r].astype(f32)).astype(o1_ref.dtype)
        o2_ref[r, :] = (softmax_last(h2) * z2[r].astype(f32)).astype(o2_ref.dtype)


def _choose_tb(batch, n):
    # Aim for tb*n ~= 256 MXU rows per step, bound the unroll, and keep the
    # grid length >= 2 when the batch allows it (v7x has 2 TensorCores).
    target = max(1, min(16, (256 + n - 1) // n))
    if batch >= 2:
        target = min(target, max(1, batch // 2))
    target = min(target, batch)
    tb = 1
    for d in range(1, target + 1):       # largest divisor of batch <= target
        if batch % d == 0:
            tb = d
    return tb


@functools.partial(jax.jit, static_argnames=("mxu_dtype", "tb"))
def attention_module(z1, z2, params, *, mxu_dtype=jnp.bfloat16, tb=None):
    """Forward of Attention_Module.

    z1, z2: [n, hid] (as in the PyTorch module) or [B, n, hid] batched.
    params = (ws, bs, w1, b1, w2, b2), PyTorch Linear layout ([out, in] weights).
    """
    squeeze = z1.ndim == 2
    if squeeze:
        z1, z2 = z1[None], z2[None]
    B, n, hid = z1.shape
    ws, bs, w1, b1, w2, b2 = params

    if tb is None:
        tb = _choose_tb(B, n)
    if B % tb:
        raise ValueError(f"tb={tb} must divide batch={B}")
    grid_len = B // tb
    rows = tb * n
    f32 = jnp.float32

    # One-time weight prep: transpose to [in, out] and cast to the MXU operand
    # dtype (bf16 default = native MXU path on all generations; accumulation
    # stays f32 via preferred_element_type).
    ws_t = jnp.asarray(ws).T.astype(mxu_dtype)
    w1_t = jnp.asarray(w1).T.astype(mxu_dtype)
    w2_t = jnp.asarray(w2).T.astype(mxu_dtype)
    bs_r = jnp.asarray(bs).reshape(1, n).astype(f32)
    b1_r = jnp.asarray(b1).reshape(1, hid).astype(f32)
    b2_r = jnp.asarray(b2).reshape(1, hid).astype(f32)

    # Merge batch & row dims (contiguous, layout no-op) so kernel blocks are 2-D.
    z1f = z1.reshape(B * n, hid)
    z2f = z2.reshape(B * n, hid)

    # VMEM budget: double-buffered activation/output blocks + resident weights
    # + f32 temporaries, with 2x headroom; clamp to [16 MiB, 64 MiB] (v7x cap).
    zb = jnp.dtype(z1.dtype).itemsize
    wb = jnp.dtype(mxu_dtype).itemsize
    per_step = (4 * rows * hid * zb * 2
                + (n * n + 2 * hid * hid) * wb * 2
                + 3 * 8 * 128 * 4
                + (6 * rows * hid + hid * hid + hid * n) * 4)
    vmem_limit = int(min(max(2 * per_step + (4 << 20), 16 << 20), 64 << 20))

    kernel = functools.partial(attention_kernel, tb=tb, n=n, hid=hid,
                               mxu_dtype=mxu_dtype)

    # TODO(synk): single-buffer the constant-index weight specs
    # (pipeline_mode=pl.Buffered(1)) and add a hid-tiled K-reduction fallback
    # once hid grows toward the v7x 64 MiB VMEM ceiling; also pad per-pair row
    # offsets to the sublane multiple when n is not a multiple of 8.
    o1f, o2f = pl.pallas_call(
        kernel,
        out_shape=(jax.ShapeDtypeStruct((B * n, hid), z1.dtype),
                   jax.ShapeDtypeStruct((B * n, hid), z2.dtype)),
        grid=(grid_len,),
        in_specs=[
            pl.BlockSpec((rows, hid), lambda i: (i, 0)),      # z1 tile
            pl.BlockSpec((rows, hid), lambda i: (i, 0)),      # z2 tile
            pl.BlockSpec((n, n), lambda i: (0, 0)),           # Ws.T (VMEM-resident)
            pl.BlockSpec((hid, hid), lambda i: (0, 0)),       # W1.T
            pl.BlockSpec((hid, hid), lambda i: (0, 0)),       # W2.T
            pl.BlockSpec((1, n), lambda i: (0, 0)),           # bs
            pl.BlockSpec((1, hid), lambda i: (0, 0)),         # b1
            pl.BlockSpec((1, hid), lambda i: (0, 0)),         # b2
        ],
        out_specs=(pl.BlockSpec((rows, hid), lambda i: (i, 0)),
                   pl.BlockSpec((rows, hid), lambda i: (i, 0))),
        compiler_params=pltpu.CompilerParams(
            dimension_semantics=("parallel",),
            vmem_limit_bytes=vmem_limit),
    )(z1f, z2f, ws_t, w1_t, w2_t, bs_r, b1_r, b2_r)

    o1 = o1f.reshape(B, n, hid)
    o2 = o2f.reshape(B, n, hid)
    if squeeze:
        o1, o2 = o1[0], o2[0]
    return o1, o2


if __name__ == "__main__":
    # Small shapes consistent with the module: z1, z2 are [n, hid]; B pairs.
    B, n, hid = 8, 8, 32
    key = jax.random.PRNGKey(0)
    keys = jax.random.split(key, 8)

    # PyTorch-style Linear init: U(-1/sqrt(fan_in), 1/sqrt(fan_in))
    kn = 1.0 / jnp.sqrt(jnp.float32(n))
    kh = 1.0 / jnp.sqrt(jnp.float32(hid))
    ws = jax.random.uniform(keys[0], (n, n), jnp.float32, -kn, kn)
    bs = jax.random.uniform(keys[1], (n,), jnp.float32, -kn, kn)
    w1 = jax.random.uniform(keys[2], (hid, hid), jnp.float32, -kh, kh)
    b1 = jax.random.uniform(keys[3], (hid,), jnp.float32, -kh, kh)
    w2 = jax.random.uniform(keys[4], (hid, hid), jnp.float32, -kh, kh)
    b2 = jax.random.uniform(keys[5], (hid,), jnp.float32, -kh, kh)
    params = (ws, bs, w1, b1, w2, b2)

    z1 = jax.random.normal(keys[6], (B, n, hid), jnp.float32)
    z2 = jax.random.normal(keys[7], (B, n, hid), jnp.float32)

    # Pure-JAX reference (per pair), vmapped over the batch.
    def ref_single(z1s, z2s):
        sim = z1s.T @ ws.T + bs
        C = jnp.tanh(sim @ z2s)
        a = z1s @ w1.T + b1
        b = z2s @ w2.T + b2
        h1 = jnp.tanh(a + b @ C.T)
        h2 = jnp.tanh(a @ C + b)
        return jax.nn.softmax(h1, axis=1) * z1s, jax.nn.softmax(h2, axis=1) * z2s

    r1, r2 = jax.vmap(ref_single)(z1, z2)

    # Default path: bf16 MXU operands, f32 accumulation / activations.
    o1, o2 = attention_module(z1, z2, params)
    jax.block_until_ready((o1, o2))
    assert o1.shape == (B, n, hid) and o2.shape == (B, n, hid)
    assert jnp.allclose(o1, r1, atol=3e-2, rtol=3e-2)
    assert jnp.allclose(o2, r2, atol=3e-2, rtol=3e-2)

    # f32 MXU path: tight tolerance.
    o1f, o2f = attention_module(z1, z2, params, mxu_dtype=jnp.float32)
    jax.block_until_ready((o1f, o2f))
    assert jnp.allclose(o1f, r1, atol=5e-3, rtol=5e-3)
    assert jnp.allclose(o2f, r2, atol=5e-3, rtol=5e-3)

    # Unbatched call, exactly as the PyTorch module's forward signature.
    s1, s2 = attention_module(z1[0], z2[0], params, mxu_dtype=jnp.float32)
    jax.block_until_ready((s1, s2))
    assert jnp.allclose(s1, r1[0], atol=5e-3, rtol=5e-3)
    assert jnp.allclose(s2, r2[0], atol=5e-3, rtol=5e-3)

    print("KERNEL_OK")
</pallas_src>

<mosaic_0001>
module attributes {stable_mosaic.version = 11 : i64} {
  func.func @attention_kernel(%arg0: i32, %arg1: memref<32x32xf32, #tpu.memory_space<vmem>>, %arg2: memref<32x32xf32, #tpu.memory_space<vmem>>, %arg3: memref<8x8xbf16, #tpu.memory_space<vmem>>, %arg4: memref<32x32xbf16, #tpu.memory_space<vmem>>, %arg5: memref<32x32xbf16, #tpu.memory_space<vmem>>, %arg6: memref<1x8xf32, #tpu.memory_space<vmem>>, %arg7: memref<1x32xf32, #tpu.memory_space<vmem>>, %arg8: memref<1x32xf32, #tpu.memory_space<vmem>>, %arg9: memref<32x32xf32, #tpu.memory_space<vmem>>, %arg10: memref<32x32xf32, #tpu.memory_space<vmem>>) attributes {dimension_semantics = [#tpu.dimension_semantics<parallel>], iteration_bounds = array<i64: 2>, scalar_prefetch = 0 : i64, scratch_operands = 0 : i64, tpu.core_type = #tpu.core_type<tc>, window_params = [{transform_indices = @transform_0, window_bounds = array<i64: 32, 32>}, {transform_indices = @transform_1, window_bounds = array<i64: 32, 32>}, {pipeline_mode = #tpu.pipeline_mode<synchronous>, transform_indices = @transform_2, window_bounds = array<i64: 8, 8>}, {pipeline_mode = #tpu.pipeline_mode<synchronous>, transform_indices = @transform_3, window_bounds = array<i64: 32, 32>}, {pipeline_mode = #tpu.pipeline_mode<synchronous>, transform_indices = @transform_4, window_bounds = array<i64: 32, 32>}, {pipeline_mode = #tpu.pipeline_mode<synchronous>, transform_indices = @transform_5, window_bounds = array<i64: 1, 8>}, {pipeline_mode = #tpu.pipeline_mode<synchronous>, transform_indices = @transform_6, window_bounds = array<i64: 1, 32>}, {pipeline_mode = #tpu.pipeline_mode<synchronous>, transform_indices = @transform_7, window_bounds = array<i64: 1, 32>}, {transform_indices = @transform_8, window_bounds = array<i64: 32, 32>}, {transform_indices = @transform_9, window_bounds = array<i64: 32, 32>}]} {
    %c0 = arith.constant 0 : index
    %c0_0 = arith.constant 0 : index
    %0 = vector.load %arg1[%c0, %c0_0] : memref<32x32xf32, #tpu.memory_space<vmem>>, vector<32x32xf32>
    %c0_1 = arith.constant 0 : index
    %c0_2 = arith.constant 0 : index
    %1 = vector.load %arg2[%c0_1, %c0_2] : memref<32x32xf32, #tpu.memory_space<vmem>>, vector<32x32xf32>
    %2 = arith.truncf %0 : vector<32x32xf32> to vector<32x32xbf16>
    %3 = arith.truncf %1 : vector<32x32xf32> to vector<32x32xbf16>
    %c0_3 = arith.constant 0 : index
    %c0_4 = arith.constant 0 : index
    %4 = vector.load %arg3[%c0_3, %c0_4] : memref<8x8xbf16, #tpu.memory_space<vmem>>, vector<8x8xbf16>
    %c0_5 = arith.constant 0 : index
    %c0_6 = arith.constant 0 : index
    %5 = vector.load %arg4[%c0_5, %c0_6] : memref<32x32xbf16, #tpu.memory_space<vmem>>, vector<32x32xbf16>
    %c0_7 = arith.constant 0 : index
    %c0_8 = arith.constant 0 : index
    %6 = vector.load %arg5[%c0_7, %c0_8] : memref<32x32xbf16, #tpu.memory_space<vmem>>, vector<32x32xbf16>
    %c0_9 = arith.constant 0 : index
    %c0_10 = arith.constant 0 : index
    %7 = vector.load %arg6[%c0_9, %c0_10] : memref<1x8xf32, #tpu.memory_space<vmem>>, vector<1x8xf32>
    %8 = vector.shape_cast %7 : vector<1x8xf32> to vector<1x8xf32>
    %9 = vector.broadcast %8 : vector<1x8xf32> to vector<32x8xf32>
    %c0_11 = arith.constant 0 : index
    %c0_12 = arith.constant 0 : index
    %10 = vector.load %arg7[%c0_11, %c0_12] : memref<1x32xf32, #tpu.memory_space<vmem>>, vector<1x32xf32>
    %c0_13 = arith.constant 0 : index
    %c0_14 = arith.constant 0 : index
    %11 = vector.load %arg8[%c0_13, %c0_14] : memref<1x32xf32, #tpu.memory_space<vmem>>, vector<1x32xf32>
    %cst = arith.constant dense<0.000000e+00> : vector<32x32xf32>
    %12 = tpu.matmul %2, %5, %cst {dimension_numbers = #tpu.dot_dimension_numbers<[1], [0], [0], [1], [0, 0, 1, 1], [], []>} : vector<32x32xbf16>, vector<32x32xbf16>, vector<32x32xf32> -> vector<32x32xf32>
    %13 = vector.broadcast %10 : vector<1x32xf32> to vector<32x32xf32>
    %14 = arith.addf %12, %13 : vector<32x32xf32>
    %cst_15 = arith.constant dense<0.000000e+00> : vector<32x32xf32>
    %15 = tpu.matmul %3, %6, %cst_15 {dimension_numbers = #tpu.dot_dimension_numbers<[1], [0], [0], [1], [0, 0, 1, 1], [], []>} : vector<32x32xbf16>, vector<32x32xbf16>, vector<32x32xf32> -> vector<32x32xf32>
    %16 = vector.broadcast %11 : vector<1x32xf32> to vector<32x32xf32>
    %17 = arith.addf %15, %16 : vector<32x32xf32>
    %18 = arith.truncf %14 : vector<32x32xf32> to vector<32x32xbf16>
    %19 = arith.truncf %17 : vector<32x32xf32> to vector<32x32xbf16>
    %20 = vector.extract_strided_slice %2 {offsets = [0, 0], sizes = [8, 32], strides = [1, 1]} : vector<32x32xbf16> to vector<8x32xbf16>
    %21 = vector.extract_strided_slice %3 {offsets = [0, 0], sizes = [8, 32], strides = [1, 1]} : vector<32x32xbf16> to vector<8x32xbf16>
    %cst_16 = arith.constant dense<0.000000e+00> : vector<32x8xf32>
    %22 = tpu.matmul %20, %4, %cst_16 {dimension_numbers = #tpu.dot_dimension_numbers<[0], [0], [1], [1], [0, 1, 1, 1], [], []>} : vector<8x32xbf16>, vector<8x8xbf16>, vector<32x8xf32> -> vector<32x8xf32>
    %23 = arith.addf %22, %9 : vector<32x8xf32>
    %24 = arith.truncf %23 : vector<32x8xf32> to vector<32x8xbf16>
    %cst_17 = arith.constant dense<0.000000e+00> : vector<32x32xf32>
    %25 = tpu.matmul %24, %21, %cst_17 {dimension_numbers = #tpu.dot_dimension_numbers<[1], [0], [0], [1], [0, 0, 1, 1], [], []>} : vector<32x8xbf16>, vector<8x32xbf16>, vector<32x32xf32> -> vector<32x32xf32>
    %26 = math.tanh %25 : vector<32x32xf32>
    %27 = arith.truncf %26 : vector<32x32xf32> to vector<32x32xbf16>
    %28 = vector.extract_strided_slice %14 {offsets = [0, 0], sizes = [8, 32], strides = [1, 1]} : vector<32x32xf32> to vector<8x32xf32>
    %29 = vector.extract_strided_slice %19 {offsets = [0, 0], sizes = [8, 32], strides = [1, 1]} : vector<32x32xbf16> to vector<8x32xbf16>
    %cst_18 = arith.constant dense<0.000000e+00> : vector<8x32xf32>
    %30 = tpu.matmul %29, %27, %cst_18 {dimension_numbers = #tpu.dot_dimension_numbers<[1], [1], [0], [0], [0, 0, 1, 0], [], []>} : vector<8x32xbf16>, vector<32x32xbf16>, vector<8x32xf32> -> vector<8x32xf32>
    %31 = arith.addf %28, %30 : vector<8x32xf32>
    %32 = math.tanh %31 : vector<8x32xf32>
    %33 = vector.extract_strided_slice %18 {offsets = [0, 0], sizes = [8, 32], strides = [1, 1]} : vector<32x32xbf16> to vector<8x32xbf16>
    %cst_19 = arith.constant dense<0.000000e+00> : vector<8x32xf32>
    %34 = tpu.matmul %33, %27, %cst_19 {dimension_numbers = #tpu.dot_dimension_numbers<[1], [0], [0], [1], [0, 0, 1, 1], [], []>} : vector<8x32xbf16>, vector<32x32xbf16>, vector<8x32xf32> -> vector<8x32xf32>
    %35 = vector.extract_strided_slice %17 {offsets = [0, 0], sizes = [8, 32], strides = [1, 1]} : vector<32x32xf32> to vector<8x32xf32>
    %36 = arith.addf %34, %35 : vector<8x32xf32>
    %37 = math.tanh %36 : vector<8x32xf32>
    %cst_20 = arith.constant dense<0xFF800000> : vector<8xf32>
    %38 = vector.multi_reduction <maximumf>, %32, %cst_20 [1] : vector<8x32xf32> to vector<8xf32>
    %39 = vector.shape_cast %38 : vector<8xf32> to vector<8x1xf32>
    %40 = vector.broadcast %39 : vector<8x1xf32> to vector<8x32xf32>
    %41 = arith.subf %32, %40 : vector<8x32xf32>
    %42 = math.exp %41 : vector<8x32xf32>
    %cst_21 = arith.constant dense<0.000000e+00> : vector<8xf32>
    %43 = vector.multi_reduction <add>, %42, %cst_21 [1] : vector<8x32xf32> to vector<8xf32>
    %44 = vector.shape_cast %43 : vector<8xf32> to vector<8x1xf32>
    %45 = tpu.reciprocal %44 {approx = true} : vector<8x1xf32> -> vector<8x1xf32>
    %46 = vector.broadcast %45 : vector<8x1xf32> to vector<8x32xf32>
    %47 = arith.mulf %42, %46 : vector<8x32xf32>
    %48 = vector.extract_strided_slice %0 {offsets = [0, 0], sizes = [8, 32], strides = [1, 1]} : vector<32x32xf32> to vector<8x32xf32>
    %49 = arith.mulf %47, %48 : vector<8x32xf32>
    %c0_22 = arith.constant 0 : index
    %c0_23 = arith.constant 0 : index
    %50 = vector.load %arg9[%c0_22, %c0_23] : memref<32x32xf32, #tpu.memory_space<vmem>>, vector<8x32xf32>
    tpu.vector_store %arg9[%c0_22, %c0_23], %49 {strides = array<i32>} : memref<32x32xf32, #tpu.memory_space<vmem>>, vector<8x32xf32>,
    %cst_24 = arith.constant dense<0xFF800000> : vector<8xf32>
    %51 = vector.multi_reduction <maximumf>, %37, %cst_24 [1] : vector<8x32xf32> to vector<8xf32>
    %52 = vector.shape_cast %51 : vector<8xf32> to vector<8x1xf32>
    %53 = vector.broadcast %52 : vector<8x1xf32> to vector<8x32xf32>
    %54 = arith.subf %37, %53 : vector<8x32xf32>
    %55 = math.exp %54 : vector<8x32xf32>
    %cst_25 = arith.constant dense<0.000000e+00> : vector<8xf32>
    %56 = vector.multi_reduction <add>, %55, %cst_25 [1] : vector<8x32xf32> to vector<8xf32>
    %57 = vector.shape_cast %56 : vector<8xf32> to vector<8x1xf32>
    %58 = tpu.reciprocal %57 {approx = true} : vector<8x1xf32> -> vector<8x1xf32>
    %59 = vector.broadcast %58 : vector<8x1xf32> to vector<8x32xf32>
    %60 = arith.mulf %55, %59 : vector<8x32xf32>
    %61 = vector.extract_strided_slice %1 {offsets = [0, 0], sizes = [8, 32], strides = [1, 1]} : vector<32x32xf32> to vector<8x32xf32>
    %62 = arith.mulf %60, %61 : vector<8x32xf32>
    %c0_26 = arith.constant 0 : index
    %c0_27 = arith.constant 0 : index
    %63 = vector.load %arg10[%c0_26, %c0_27] : memref<32x32xf32, #tpu.memory_space<vmem>>, vector<8x32xf32>
    tpu.vector_store %arg10[%c0_26, %c0_27], %62 {strides = array<i32>} : memref<32x32xf32, #tpu.memory_space<vmem>>, vector<8x32xf32>,
    %64 = vector.extract_strided_slice %2 {offsets = [8, 0], sizes = [8, 32], strides = [1, 1]} : vector<32x32xbf16> to vector<8x32xbf16>
    %65 = vector.extract_strided_slice %3 {offsets = [8, 0], sizes = [8, 32], strides = [1, 1]} : vector<32x32xbf16> to vector<8x32xbf16>
    %cst_28 = arith.constant dense<0.000000e+00> : vector<32x8xf32>
    %66 = tpu.matmul %64, %4, %cst_28 {dimension_numbers = #tpu.dot_dimension_numbers<[0], [0], [1], [1], [0, 1, 1, 1], [], []>} : vector<8x32xbf16>, vector<8x8xbf16>, vector<32x8xf32> -> vector<32x8xf32>
    %67 = arith.addf %66, %9 : vector<32x8xf32>
    %68 = arith.truncf %67 : vector<32x8xf32> to vector<32x8xbf16>
    %cst_29 = arith.constant dense<0.000000e+00> : vector<32x32xf32>
    %69 = tpu.matmul %68, %65, %cst_29 {dimension_numbers = #tpu.dot_dimension_numbers<[1], [0], [0], [1], [0, 0, 1, 1], [], []>} : vector<32x8xbf16>, vector<8x32xbf16>, vector<32x32xf32> -> vector<32x32xf32>
    %70 = math.tanh %69 : vector<32x32xf32>
    %71 = arith.truncf %70 : vector<32x32xf32> to vector<32x32xbf16>
    %72 = vector.extract_strided_slice %14 {offsets = [8, 0], sizes = [8, 32], strides = [1, 1]} : vector<32x32xf32> to vector<8x32xf32>
    %73 = vector.extract_strided_slice %19 {offsets = [8, 0], sizes = [8, 32], strides = [1, 1]} : vector<32x32xbf16> to vector<8x32xbf16>
    %cst_30 = arith.constant dense<0.000000e+00> : vector<8x32xf32>
    %74 = tpu.matmul %73, %71, %cst_30 {dimension_numbers = #tpu.dot_dimension_numbers<[1], [1], [0], [0], [0, 0, 1, 0], [], []>} : vector<8x32xbf16>, vector<32x32xbf16>, vector<8x32xf32> -> vector<8x32xf32>
    %75 = arith.addf %72, %74 : vector<8x32xf32>
    %76 = math.tanh %75 : vector<8x32xf32>
    %77 = vector.extract_strided_slice %18 {offsets = [8, 0], sizes = [8, 32], strides = [1, 1]} : vector<32x32xbf16> to vector<8x32xbf16>
    %cst_31 = arith.constant dense<0.000000e+00> : vector<8x32xf32>
    %78 = tpu.matmul %77, %71, %cst_31 {dimension_numbers = #tpu.dot_dimension_numbers<[1], [0], [0], [1], [0, 0, 1, 1], [], []>} : vector<8x32xbf16>, vector<32x32xbf16>, vector<8x32xf32> -> vector<8x32xf32>
    %79 = vector.extract_strided_slice %17 {offsets = [8, 0], sizes = [8, 32], strides = [1, 1]} : vector<32x32xf32> to vector<8x32xf32>
    %80 = arith.addf %78, %79 : vector<8x32xf32>
    %81 = math.tanh %80 : vector<8x32xf32>
    %cst_32 = arith.constant dense<0xFF800000> : vector<8xf32>
    %82 = vector.multi_reduction <maximumf>, %76, %cst_32 [1] : vector<8x32xf32> to vector<8xf32>
    %83 = vector.shape_cast %82 : vector<8xf32> to vector<8x1xf32>
    %84 = vector.broadcast %83 : vector<8x1xf32> to vector<8x32xf32>
    %85 = arith.subf %76, %84 : vector<8x32xf32>
    %86 = math.exp %85 : vector<8x32xf32>
    %cst_33 = arith.constant dense<0.000000e+00> : vector<8xf32>
    %87 = vector.multi_reduction <add>, %86, %cst_33 [1] : vector<8x32xf32> to vector<8xf32>
    %88 = vector.shape_cast %87 : vector<8xf32> to vector<8x1xf32>
    %89 = tpu.reciprocal %88 {approx = true} : vector<8x1xf32> -> vector<8x1xf32>
    %90 = vector.broadcast %89 : vector<8x1xf32> to vector<8x32xf32>
    %91 = arith.mulf %86, %90 : vector<8x32xf32>
    %92 = vector.extract_strided_slice %0 {offsets = [8, 0], sizes = [8, 32], strides = [1, 1]} : vector<32x32xf32> to vector<8x32xf32>
    %93 = arith.mulf %91, %92 : vector<8x32xf32>
    %c8 = arith.constant 8 : index
    %c0_34 = arith.constant 0 : index
    %94 = vector.load %arg9[%c8, %c0_34] : memref<32x32xf32, #tpu.memory_space<vmem>>, vector<8x32xf32>
    tpu.vector_store %arg9[%c8, %c0_34], %93 {strides = array<i32>} : memref<32x32xf32, #tpu.memory_space<vmem>>, vector<8x32xf32>,
    %cst_35 = arith.constant dense<0xFF800000> : vector<8xf32>
    %95 = vector.multi_reduction <maximumf>, %81, %cst_35 [1] : vector<8x32xf32> to vector<8xf32>
    %96 = vector.shape_cast %95 : vector<8xf32> to vector<8x1xf32>
    %97 = vector.broadcast %96 : vector<8x1xf32> to vector<8x32xf32>
    %98 = arith.subf %81, %97 : vector<8x32xf32>
    %99 = math.exp %98 : vector<8x32xf32>
    %cst_36 = arith.constant dense<0.000000e+00> : vector<8xf32>
    %100 = vector.multi_reduction <add>, %99, %cst_36 [1] : vector<8x32xf32> to vector<8xf32>
    %101 = vector.shape_cast %100 : vector<8xf32> to vector<8x1xf32>
    %102 = tpu.reciprocal %101 {approx = true} : vector<8x1xf32> -> vector<8x1xf32>
    %103 = vector.broadcast %102 : vector<8x1xf32> to vector<8x32xf32>
    %104 = arith.mulf %99, %103 : vector<8x32xf32>
    %105 = vector.extract_strided_slice %1 {offsets = [8, 0], sizes = [8, 32], strides = [1, 1]} : vector<32x32xf32> to vector<8x32xf32>
    %106 = arith.mulf %104, %105 : vector<8x32xf32>
    %c8_37 = arith.constant 8 : index
    %c0_38 = arith.constant 0 : index
    %107 = vector.load %arg10[%c8_37, %c0_38] : memref<32x32xf32, #tpu.memory_space<vmem>>, vector<8x32xf32>
    tpu.vector_store %arg10[%c8_37, %c0_38], %106 {strides = array<i32>} : memref<32x32xf32, #tpu.memory_space<vmem>>, vector<8x32xf32>,
    %108 = vector.extract_strided_slice %2 {offsets = [16, 0], sizes = [8, 32], strides = [1, 1]} : vector<32x32xbf16> to vector<8x32xbf16>
    %109 = vector.extract_strided_slice %3 {offsets = [16, 0], sizes = [8, 32], strides = [1, 1]} : vector<32x32xbf16> to vector<8x32xbf16>
    %cst_39 = arith.constant dense<0.000000e+00> : vector<32x8xf32>
    %110 = tpu.matmul %108, %4, %cst_39 {dimension_numbers = #tpu.dot_dimension_numbers<[0], [0], [1], [1], [0, 1, 1, 1], [], []>} : vector<8x32xbf16>, vector<8x8xbf16>, vector<32x8xf32> -> vector<32x8xf32>
    %111 = arith.addf %110, %9 : vector<32x8xf32>
    %112 = arith.truncf %111 : vector<32x8xf32> to vector<32x8xbf16>
    %cst_40 = arith.constant dense<0.000000e+00> : vector<32x32xf32>
    %113 = tpu.matmul %112, %109, %cst_40 {dimension_numbers = #tpu.dot_dimension_numbers<[1], [0], [0], [1], [0, 0, 1, 1], [], []>} : vector<32x8xbf16>, vector<8x32xbf16>, vector<32x32xf32> -> vector<32x32xf32>
    %114 = math.tanh %113 : vector<32x32xf32>
    %115 = arith.truncf %114 : vector<32x32xf32> to vector<32x32xbf16>
    %116 = vector.extract_strided_slice %14 {offsets = [16, 0], sizes = [8, 32], strides = [1, 1]} : vector<32x32xf32> to vector<8x32xf32>
    %117 = vector.extract_strided_slice %19 {offsets = [16, 0], sizes = [8, 32], strides = [1, 1]} : vector<32x32xbf16> to vector<8x32xbf16>
    %cst_41 = arith.constant dense<0.000000e+00> : vector<8x32xf32>
    %118 = tpu.matmul %117, %115, %cst_41 {dimension_numbers = #tpu.dot_dimension_numbers<[1], [1], [0], [0], [0, 0, 1, 0], [], []>} : vector<8x32xbf16>, vector<32x32xbf16>, vector<8x32xf32> -> vector<8x32xf32>
    %119 = arith.addf %116, %118 : vector<8x32xf32>
    %120 = math.tanh %119 : vector<8x32xf32>
    %121 = vector.extract_strided_slice %18 {offsets = [16, 0], sizes = [8, 32], strides = [1, 1]} : vector<32x32xbf16> to vector<8x32xbf16>
    %cst_42 = arith.constant dense<0.000000e+00> : vector<8x32xf32>
    %122 = tpu.matmul %121, %115, %cst_42 {dimension_numbers = #tpu.dot_dimension_numbers<[1], [0], [0], [1], [0, 0, 1, 1], [], []>} : vector<8x32xbf16>, vector<32x32xbf16>, vector<8x32xf32> -> vector<8x32xf32>
    %123 = vector.extract_strided_slice %17 {offsets = [16, 0], sizes = [8, 32], strides = [1, 1]} : vector<32x32xf32> to vector<8x32xf32>
    %124 = arith.addf %122, %123 : vector<8x32xf32>
    %125 = math.tanh %124 : vector<8x32xf32>
    %cst_43 = arith.constant dense<0xFF800000> : vector<8xf32>
    %126 = vector.multi_reduction <maximumf>, %120, %cst_43 [1] : vector<8x32xf32> to vector<8xf32>
    %127 = vector.shape_cast %126 : vector<8xf32> to vector<8x1xf32>
    %128 = vector.broadcast %127 : vector<8x1xf32> to vector<8x32xf32>
    %129 = arith.subf %120, %128 : vector<8x32xf32>
    %130 = math.exp %129 : vector<8x32xf32>
    %cst_44 = arith.constant dense<0.000000e+00> : vector<8xf32>
    %131 = vector.multi_reduction <add>, %130, %cst_44 [1] : vector<8x32xf32> to vector<8xf32>
    %132 = vector.shape_cast %131 : vector<8xf32> to vector<8x1xf32>
    %133 = tpu.reciprocal %132 {approx = true} : vector<8x1xf32> -> vector<8x1xf32>
    %134 = vector.broadcast %133 : vector<8x1xf32> to vector<8x32xf32>
    %135 = arith.mulf %130, %134 : vector<8x32xf32>
    %136 = vector.extract_strided_slice %0 {offsets = [16, 0], sizes = [8, 32], strides = [1, 1]} : vector<32x32xf32> to vector<8x32xf32>
    %137 = arith.mulf %135, %136 : vector<8x32xf32>
    %c16 = arith.constant 16 : index
    %c0_45 = arith.constant 0 : index
    %138 = vector.load %arg9[%c16, %c0_45] : memref<32x32xf32, #tpu.memory_space<vmem>>, vector<8x32xf32>
    tpu.vector_store %arg9[%c16, %c0_45], %137 {strides = array<i32>} : memref<32x32xf32, #tpu.memory_space<vmem>>, vector<8x32xf32>,
    %cst_46 = arith.constant dense<0xFF800000> : vector<8xf32>
    %139 = vector.multi_reduction <maximumf>, %125, %cst_46 [1] : vector<8x32xf32> to vector<8xf32>
    %140 = vector.shape_cast %139 : vector<8xf32> to vector<8x1xf32>
    %141 = vector.broadcast %140 : vector<8x1xf32> to vector<8x32xf32>
    %142 = arith.subf %125, %141 : vector<8x32xf32>
    %143 = math.exp %142 : vector<8x32xf32>
    %cst_47 = arith.constant dense<0.000000e+00> : vector<8xf32>
    %144 = vector.multi_reduction <add>, %143, %cst_47 [1] : vector<8x32xf32> to vector<8xf32>
    %145 = vector.shape_cast %144 : vector<8xf32> to vector<8x1xf32>
    %146 = tpu.reciprocal %145 {approx = true} : vector<8x1xf32> -> vector<8x1xf32>
    %147 = vector.broadcast %146 : vector<8x1xf32> to vector<8x32xf32>
    %148 = arith.mulf %143, %147 : vector<8x32xf32>
    %149 = vector.extract_strided_slice %1 {offsets = [16, 0], sizes = [8, 32], strides = [1, 1]} : vector<32x32xf32> to vector<8x32xf32>
    %150 = arith.mulf %148, %149 : vector<8x32xf32>
    %c16_48 = arith.constant 16 : index
    %c0_49 = arith.constant 0 : index
    %151 = vector.load %arg10[%c16_48, %c0_49] : memref<32x32xf32, #tpu.memory_space<vmem>>, vector<8x32xf32>
    tpu.vector_store %arg10[%c16_48, %c0_49], %150 {strides = array<i32>} : memref<32x32xf32, #tpu.memory_space<vmem>>, vector<8x32xf32>,
    %152 = vector.extract_strided_slice %2 {offsets = [24, 0], sizes = [8, 32], strides = [1, 1]} : vector<32x32xbf16> to vector<8x32xbf16>
    %153 = vector.extract_strided_slice %3 {offsets = [24, 0], sizes = [8, 32], strides = [1, 1]} : vector<32x32xbf16> to vector<8x32xbf16>
    %cst_50 = arith.constant dense<0.000000e+00> : vector<32x8xf32>
    %154 = tpu.matmul %152, %4, %cst_50 {dimension_numbers = #tpu.dot_dimension_numbers<[0], [0], [1], [1], [0, 1, 1, 1], [], []>} : vector<8x32xbf16>, vector<8x8xbf16>, vector<32x8xf32> -> vector<32x8xf32>
    %155 = arith.addf %154, %9 : vector<32x8xf32>
    %156 = arith.truncf %155 : vector<32x8xf32> to vector<32x8xbf16>
    %cst_51 = arith.constant dense<0.000000e+00> : vector<32x32xf32>
    %157 = tpu.matmul %156, %153, %cst_51 {dimension_numbers = #tpu.dot_dimension_numbers<[1], [0], [0], [1], [0, 0, 1, 1], [], []>} : vector<32x8xbf16>, vector<8x32xbf16>, vector<32x32xf32> -> vector<32x32xf32>
    %158 = math.tanh %157 : vector<32x32xf32>
    %159 = arith.truncf %158 : vector<32x32xf32> to vector<32x32xbf16>
    %160 = vector.extract_strided_slice %14 {offsets = [24, 0], sizes = [8, 32], strides = [1, 1]} : vector<32x32xf32> to vector<8x32xf32>
    %161 = vector.extract_strided_slice %19 {offsets = [24, 0], sizes = [8, 32], strides = [1, 1]} : vector<32x32xbf16> to vector<8x32xbf16>
    %cst_52 = arith.constant dense<0.000000e+00> : vector<8x32xf32>
    %162 = tpu.matmul %161, %159, %cst_52 {dimension_numbers = #tpu.dot_dimension_numbers<[1], [1], [0], [0], [0, 0, 1, 0], [], []>} : vector<8x32xbf16>, vector<32x32xbf16>, vector<8x32xf32> -> vector<8x32xf32>
    %163 = arith.addf %160, %162 : vector<8x32xf32>
    %164 = math.tanh %163 : vector<8x32xf32>
    %165 = vector.extract_strided_slice %18 {offsets = [24, 0], sizes = [8, 32], strides = [1, 1]} : vector<32x32xbf16> to vector<8x32xbf16>
    %cst_53 = arith.constant dense<0.000000e+00> : vector<8x32xf32>
    %166 = tpu.matmul %165, %159, %cst_53 {dimension_numbers = #tpu.dot_dimension_numbers<[1], [0], [0], [1], [0, 0, 1, 1], [], []>} : vector<8x32xbf16>, vector<32x32xbf16>, vector<8x32xf32> -> vector<8x32xf32>
    %167 = vector.extract_strided_slice %17 {offsets = [24, 0], sizes = [8, 32], strides = [1, 1]} : vector<32x32xf32> to vector<8x32xf32>
    %168 = arith.addf %166, %167 : vector<8x32xf32>
    %169 = math.tanh %168 : vector<8x32xf32>
    %cst_54 = arith.constant dense<0xFF800000> : vector<8xf32>
    %170 = vector.multi_reduction <maximumf>, %164, %cst_54 [1] : vector<8x32xf32> to vector<8xf32>
    %171 = vector.shape_cast %170 : vector<8xf32> to vector<8x1xf32>
    %172 = vector.broadcast %171 : vector<8x1xf32> to vector<8x32xf32>
    %173 = arith.subf %164, %172 : vector<8x32xf32>
    %174 = math.exp %173 : vector<8x32xf32>
    %cst_55 = arith.constant dense<0.000000e+00> : vector<8xf32>
    %175 = vector.multi_reduction <add>, %174, %cst_55 [1] : vector<8x32xf32> to vector<8xf32>
    %176 = vector.shape_cast %175 : vector<8xf32> to vector<8x1xf32>
    %177 = tpu.reciprocal %176 {approx = true} : vector<8x1xf32> -> vector<8x1xf32>
    %178 = vector.broadcast %177 : vector<8x1xf32> to vector<8x32xf32>
    %179 = arith.mulf %174, %178 : vector<8x32xf32>
    %180 = vector.extract_strided_slice %0 {offsets = [24, 0], sizes = [8, 32], strides = [1, 1]} : vector<32x32xf32> to vector<8x32xf32>
    %181 = arith.mulf %179, %180 : vector<8x32xf32>
    %c24 = arith.constant 24 : index
    %c0_56 = arith.constant 0 : index
    %182 = vector.load %arg9[%c24, %c0_56] : memref<32x32xf32, #tpu.memory_space<vmem>>, vector<8x32xf32>
    tpu.vector_store %arg9[%c24, %c0_56], %181 {strides = array<i32>} : memref<32x32xf32, #tpu.memory_space<vmem>>, vector<8x32xf32>,
    %cst_57 = arith.constant dense<0xFF800000> : vector<8xf32>
    %183 = vector.multi_reduction <maximumf>, %169, %cst_57 [1] : vector<8x32xf32> to vector<8xf32>
    %184 = vector.shape_cast %183 : vector<8xf32> to vector<8x1xf32>
    %185 = vector.broadcast %184 : vector<8x1xf32> to vector<8x32xf32>
    %186 = arith.subf %169, %185 : vector<8x32xf32>
    %187 = math.exp %186 : vector<8x32xf32>
    %cst_58 = arith.constant dense<0.000000e+00> : vector<8xf32>
    %188 = vector.multi_reduction <add>, %187, %cst_58 [1] : vector<8x32xf32> to vector<8xf32>
    %189 = vector.shape_cast %188 : vector<8xf32> to vector<8x1xf32>
    %190 = tpu.reciprocal %189 {approx = true} : vector<8x1xf32> -> vector<8x1xf32>
    %191 = vector.broadcast %190 : vector<8x1xf32> to vector<8x32xf32>
    %192 = arith.mulf %187, %191 : vector<8x32xf32>
    %193 = vector.extract_strided_slice %1 {offsets = [24, 0], sizes = [8, 32], strides = [1, 1]} : vector<32x32xf32> to vector<8x32xf32>
    %194 = arith.mulf %192, %193 : vector<8x32xf32>
    %c24_59 = arith.constant 24 : index
    %c0_60 = arith.constant 0 : index
    %195 = vector.load %arg10[%c24_59, %c0_60] : memref<32x32xf32, #tpu.memory_space<vmem>>, vector<8x32xf32>
    tpu.vector_store %arg10[%c24_59, %c0_60], %194 {strides = array<i32>} : memref<32x32xf32, #tpu.memory_space<vmem>>, vector<8x32xf32>,
    return
  }
  func.func @transform_0(%arg0: i32) -> (i32, i32) {
    %c0_i32 = arith.constant 0 : i32
    %c0_i32_0 = arith.constant 0 : i32
    return %arg0, %c0_i32 : i32, i32
  }
  func.func @transform_1(%arg0: i32) -> (i32, i32) {
    %c0_i32 = arith.constant 0 : i32
    %c0_i32_0 = arith.constant 0 : i32
    return %arg0, %c0_i32 : i32, i32
  }
  func.func @transform_2(%arg0: i32) -> (i32, i32) {
    %c0_i32 = arith.constant 0 : i32
    %c0_i32_0 = arith.constant 0 : i32
    %c0_i32_1 = arith.constant 0 : i32
    return %c0_i32, %c0_i32_0 : i32, i32
  }
  func.func @transform_3(%arg0: i32) -> (i32, i32) {
    %c0_i32 = arith.constant 0 : i32
    %c0_i32_0 = arith.constant 0 : i32
    %c0_i32_1 = arith.constant 0 : i32
    return %c0_i32, %c0_i32_0 : i32, i32
  }
  func.func @transform_4(%arg0: i32) -> (i32, i32) {
    %c0_i32 = arith.constant 0 : i32
    %c0_i32_0 = arith.constant 0 : i32
    %c0_i32_1 = arith.constant 0 : i32
    return %c0_i32, %c0_i32_0 : i32, i32
  }
  func.func @transform_5(%arg0: i32) -> (i32, i32) {
    %c0_i32 = arith.constant 0 : i32
    %c0_i32_0 = arith.constant 0 : i32
    %c0_i32_1 = arith.constant 0 : i32
    return %c0_i32, %c0_i32_0 : i32, i32
  }
  func.func @transform_6(%arg0: i32) -> (i32, i32) {
    %c0_i32 = arith.constant 0 : i32
    %c0_i32_0 = arith.constant 0 : i32
    %c0_i32_1 = arith.constant 0 : i32
    return %c0_i32, %c0_i32_0 : i32, i32
  }
  func.func @transform_7(%arg0: i32) -> (i32, i32) {
    %c0_i32 = arith.constant 0 : i32
    %c0_i32_0 = arith.constant 0 : i32
    %c0_i32_1 = arith.constant 0 : i32
    return %c0_i32, %c0_i32_0 : i32, i32
  }
  func.func @transform_8(%arg0: i32) -> (i32, i32) {
    %c0_i32 = arith.constant 0 : i32
    %c0_i32_0 = arith.constant 0 : i32
    return %arg0, %c0_i32 : i32, i32
  }
  func.func @transform_9(%arg0: i32) -> (i32, i32) {
    %c0_i32 = arith.constant 0 : i32
    %c0_i32_0 = arith.constant 0 : i32
    return %arg0, %c0_i32 : i32, i32
  }
}

</mosaic_0001>

<llo_original>
// kernel: attention_module.1
$region0: #{attention_module.1}
  #allocation0 [shape = 'u32[]', space=smem, size = 0x4, offset = 0x4, fixed_abs, tag = 'smem constant byte address 0x4 - core index']
  #allocation1 [shape = 'u32[144,128]{1,0:T(1,128)}', space=vmem, size = 0x12000, scoped, tag = 'internal scratch']
  %s0 = inlined_call_operand.vmem [shape: f32[64,32], index: 0, kind: input, shape index: {}]
  %s1 = inlined_call_operand.vmem [shape: f32[64,32], index: 1, kind: input, shape index: {}]
  %s2 = inlined_call_operand.vmem [shape: bf16[8,8], index: 2, kind: input, shape index: {}]
  %s3 = inlined_call_operand.vmem [shape: bf16[32,32], index: 3, kind: input, shape index: {}]
  %s4 = inlined_call_operand.vmem [shape: bf16[32,32], index: 4, kind: input, shape index: {}]
  %s5 = inlined_call_operand.hbm [shape: f32[1,8], index: 5, kind: input, shape index: {}]
  %s6 = inlined_call_operand.hbm [shape: f32[1,32], index: 6, kind: input, shape index: {}]
  %s7 = inlined_call_operand.vmem [shape: f32[1,32], index: 7, kind: input, shape index: {}]
  %s8 = inlined_call_operand.hbm [shape: f32[64,32], index: 8, kind: output, shape index: {0}]
  %s9 = inlined_call_operand.hbm [shape: f32[64,32], index: 9, kind: output, shape index: {1}]
  %10 = xla_tuple %s8, %s9
  %s11 = sld [smem:[#allocation0]]
  $region81: #{attention_module.1} parent=0
    _
  %s13 = ssub.s32 1, %s11
  %s14 = scalar_select 0, %s13, %s11
  $region1: #{attention_module.1} parent=0
    #allocation2 [shape = 'u8[512]{0}', space=vmem, size = 0x400, scoped, tag = 'input window, operand 5, single buffered']
    #allocation3 [shape = 's32[2]{0}', space=sflag, size = 0x8, scoped, tag = 'scoped memory for attention_module.1']
    #allocation4 [shape = 's32[2]{0}', space=sflag, size = 0x8, scoped, tag = 'scoped memory for attention_module.1']
    #allocation5 [shape = 'u8[512]{0}', space=vmem, size = 0x400, scoped, tag = 'input window, operand 6, single buffered']
    #allocation6 [shape = 's32[1]{0}', space=sflag, size = 0x4, scoped, tag = 'scoped memory for attention_module.1']
    #allocation7 [shape = 'u8[32768]{0}', space=vmem, size = 0x8000, scoped, tag = 'output window, operand 0']
    #allocation8 [shape = 'u8[32768]{0}', space=vmem, size = 0x8000, scoped, tag = 'output window, operand 1']
    #allocation9 [shape = 's32[2]{0}', space=sflag, size = 0x8, scoped, tag = 'scoped memory for attention_module.1']
    %15 = vsyncpa [#allocation3], 0
    %16 = vsyncpa [#allocation6], 0
    %17 = vsyncpa [#allocation4], 0
    %s18 = scalar_lea.sflag [#allocation4], 1
    %19 = vsyncpa %s18, 0
    %20 = vsyncpa [#allocation9], 0
    %s21 = scalar_lea.sflag [#allocation9], 1
    %22 = vsyncpa %s21, 0
    loop: start=0, step=1, limit=4
    $region2: #{attention_module.1} parent=1 // loop_pre_header
      _
    $region3: #{attention_module.1} parent=1 // loop_header
      %s24 = sphi 0, %s28
      %p25 = scmp.ge.s32.totalorder %s24, 4
      %s34 = sphi 0, %s36
      %s37 = sphi 0, %s34
      %s38 = sphi 0, %s37
      %s54 = sphi 0, %s38
      %s60 = sphi 0, %s62
      %s63 = sphi 0, %s60
      %s64 = sphi 0, %s63
      %s80 = sphi 0, %s64
      %s84 = sphi 0, %s84
      %s86 = sphi 0, %s84
      %s87 = sphi 0, %s86
      %s101 = sphi 0, %s87
      %s105 = sphi 0, %s105
      %s107 = sphi 0, %s105
      %s108 = sphi 0, %s107
      %s122 = sphi 0, %s108
      %s126 = sphi 0, %s126
      %s128 = sphi 0, %s126
      %s129 = sphi 0, %s128
      %s143 = sphi 0, %s129
      %s147 = sphi 0, %s147
      %s149 = sphi 0, %s147
      %s150 = sphi 0, %s149
      %s164 = sphi 0, %s150
      %s168 = sphi 0, %s168
      %s170 = sphi 0, %s168
      %s171 = sphi 0, %s170
      %s185 = sphi 0, %s171
      %s189 = sphi 0, %s189
      %s191 = sphi 0, %s189
      %s192 = sphi 0, %s191
      %s206 = sphi 0, %s192
      %s212 = sphi 0, %s214
      %s215 = sphi 0, %s212
      %s216 = sphi 0, %s215
      %s232 = sphi 0, %s216
      %s238 = sphi 0, %s240
      %s241 = sphi 0, %s238
      %s242 = sphi 0, %s241
      %s258 = sphi 0, %s242
    $region4: #{attention_module.1} parent=1 // loop_header_branch
      %27 = sbr.rel (%p25) target = $region8
    $region5: #{attention_module.1} parent=1 // loop_body
      %s29 = ssub.s32 %s24, 1
      %s30 = ssub.s32 %s24, 2
      %s31 = sadd.s32 %s24, 1
      %s32 = ssub.s32 %s24, %s31
      %p33 = scmp.eq.s32.totalorder %s32, 0
      %s35 = sadd.s32 %s34, 1
      %s36 = scalar_select %p33, %s34, %s35
      %p39 = pneg %p33
      %p40 = scmp.eq.s32.totalorder %s24, 1
      %p41 = por %p39, %p40
      %p42 = scmp.ne.s32.totalorder %s34, %s37
      %p43 = scmp.eq.s32.totalorder %s24, 0
      %p44 = por %p42, %p43
      %p45 = scmp.ne.s32.totalorder %s34, %s37
      %p46 = scmp.eq.s32.totalorder %s29, 1
      %p47 = por %p45, %p46
      %p48 = scmp.ne.s32.totalorder %s37, %s38
      %p49 = scmp.eq.s32.totalorder %s29, 0
      %p50 = por %p48, %p49
      %p51 = scmp.ne.s32.totalorder %s37, %s38
      %p52 = scmp.eq.s32.totalorder %s30, 1
      %p53 = por %p51, %p52
      %p55 = scmp.ne.s32.totalorder %s38, %s54
      %p56 = scmp.eq.s32.totalorder %s30, 0
      %p57 = por %p55, %p56
      %s58 = ssub.s32 %s24, %s31
      %p59 = scmp.eq.s32.totalorder %s58, 0
      %s61 = sadd.s32 %s60, 1
      %s62 = scalar_select %p59, %s60, %s61
      %p65 = pneg %p59
      %p66 = scmp.eq.s32.totalorder %s24, 1
      %p67 = por %p65, %p66
      %p68 = scmp.ne.s32.totalorder %s60, %s63
      %p69 = scmp.eq.s32.totalorder %s24, 0
      %p70 = por %p68, %p69
      %p71 = scmp.ne.s32.totalorder %s60, %s63
      %p72 = scmp.eq.s32.totalorder %s29, 1
      %p73 = por %p71, %p72
      %p74 = scmp.ne.s32.totalorder %s63, %s64
      %p75 = scmp.eq.s32.totalorder %s29, 0
      %p76 = por %p74, %p75
      %p77 = scmp.ne.s32.totalorder %s63, %s64
      %p78 = scmp.eq.s32.totalorder %s30, 1
      %p79 = por %p77, %p78
      %p81 = scmp.ne.s32.totalorder %s64, %s80
      %p82 = scmp.eq.s32.totalorder %s30, 0
      %p83 = por %p81, %p82
      %s85 = sadd.s32 %s84, 1
      %p88 = scmp.eq.s32.totalorder %s24, 1
      %p89 = scmp.ne.s32.totalorder %s84, %s86
      %p90 = scmp.eq.s32.totalorder %s24, 0
      %p91 = por %p89, %p90
      %p92 = scmp.ne.s32.totalorder %s84, %s86
      %p93 = scmp.eq.s32.totalorder %s29, 1
      %p94 = por %p92, %p93
      %p95 = scmp.ne.s32.totalorder %s86, %s87
      %p96 = scmp.eq.s32.totalorder %s29, 0
      %p97 = por %p95, %p96
      %p98 = scmp.ne.s32.totalorder %s86, %s87
      %p99 = scmp.eq.s32.totalorder %s30, 1
      %p100 = por %p98, %p99
      %p102 = scmp.ne.s32.totalorder %s87, %s101
      %p103 = scmp.eq.s32.totalorder %s30, 0
      %p104 = por %p102, %p103
      %s106 = sadd.s32 %s105, 1
      %p109 = scmp.eq.s32.totalorder %s24, 1
      %p110 = scmp.ne.s32.totalorder %s105, %s107
      %p111 = scmp.eq.s32.totalorder %s24, 0
      %p112 = por %p110, %p111
      %p113 = scmp.ne.s32.totalorder %s105, %s107
      %p114 = scmp.eq.s32.totalorder %s29, 1
      %p115 = por %p113, %p114
      %p116 = scmp.ne.s32.totalorder %s107, %s108
      %p117 = scmp.eq.s32.totalorder %s29, 0
      %p118 = por %p116, %p117
      %p119 = scmp.ne.s32.totalorder %s107, %s108
      %p120 = scmp.eq.s32.totalorder %s30, 1
      %p121 = por %p119, %p120
      %p123 = scmp.ne.s32.totalorder %s108, %s122
      %p124 = scmp.eq.s32.totalorder %s30, 0
      %p125 = por %p123, %p124
      %s127 = sadd.s32 %s126, 1
      %p130 = scmp.eq.s32.totalorder %s24, 1
      %p131 = scmp.ne.s32.totalorder %s126, %s128
      %p132 = scmp.eq.s32.totalorder %s24, 0
      %p133 = por %p131, %p132
      %p134 = scmp.ne.s32.totalorder %s126, %s128
      %p135 = scmp.eq.s32.totalorder %s29, 1
      %p136 = por %p134, %p135
      %p137 = scmp.ne.s32.totalorder %s128, %s129
      %p138 = scmp.eq.s32.totalorder %s29, 0
      %p139 = por %p137, %p138
      %p140 = scmp.ne.s32.totalorder %s128, %s129
      %p141 = scmp.eq.s32.totalorder %s30, 1
      %p142 = por %p140, %p141
      %p144 = scmp.ne.s32.totalorder %s129, %s143
      %p145 = scmp.eq.s32.totalorder %s30, 0
      %p146 = por %p144, %p145
      %s148 = sadd.s32 %s147, 1
      %p151 = scmp.eq.s32.totalorder %s24, 1
      %p152 = scmp.ne.s32.totalorder %s147, %s149
      %p153 = scmp.eq.s32.totalorder %s24, 0
      %p154 = por %p152, %p153
      %p155 = scmp.ne.s32.totalorder %s147, %s149
      %p156 = scmp.eq.s32.totalorder %s29, 1
      %p157 = por %p155, %p156
      %p158 = scmp.ne.s32.totalorder %s149, %s150
      %p159 = scmp.eq.s32.totalorder %s29, 0
      %p160 = por %p158, %p159
      %p161 = scmp.ne.s32.totalorder %s149, %s150
      %p162 = scmp.eq.s32.totalorder %s30, 1
      %p163 = por %p161, %p162
      %p165 = scmp.ne.s32.totalorder %s150, %s164
      %p166 = scmp.eq.s32.totalorder %s30, 0
      %p167 = por %p165, %p166
      %s169 = sadd.s32 %s168, 1
      %p172 = scmp.eq.s32.totalorder %s24, 1
      %p173 = scmp.ne.s32.totalorder %s168, %s170
      %p174 = scmp.eq.s32.totalorder %s24, 0
      %p175 = por %p173, %p174
      %p176 = scmp.ne.s32.totalorder %s168, %s170
      %p177 = scmp.eq.s32.totalorder %s29, 1
      %p178 = por %p176, %p177
      %p179 = scmp.ne.s32.totalorder %s170, %s171
      %p180 = scmp.eq.s32.totalorder %s29, 0
      %p181 = por %p179, %p180
      %p182 = scmp.ne.s32.totalorder %s170, %s171
      %p183 = scmp.eq.s32.totalorder %s30, 1
      %p184 = por %p182, %p183
      %p186 = scmp.ne.s32.totalorder %s171, %s185
      %p187 = scmp.eq.s32.totalorder %s30, 0
      %p188 = por %p186, %p187
      %s190 = sadd.s32 %s189, 1
      %p193 = scmp.eq.s32.totalorder %s24, 1
      %p194 = scmp.ne.s32.totalorder %s189, %s191
      %p195 = scmp.eq.s32.totalorder %s24, 0
      %p196 = por %p194, %p195
      %p197 = scmp.ne.s32.totalorder %s189, %s191
      %p198 = scmp.eq.s32.totalorder %s29, 1
      %p199 = por %p197, %p198
      %p200 = scmp.ne.s32.totalorder %s191, %s192
      %p201 = scmp.eq.s32.totalorder %s29, 0
      %p202 = por %p200, %p201
      %p203 = scmp.ne.s32.totalorder %s191, %s192
      %p204 = scmp.eq.s32.totalorder %s30, 1
      %p205 = por %p203, %p204
      %p207 = scmp.ne.s32.totalorder %s192, %s206
      %p208 = scmp.eq.s32.totalorder %s30, 0
      %p209 = por %p207, %p208
      %s210 = ssub.s32 %s24, %s31
      %p211 = scmp.eq.s32.totalorder %s210, 0
      %s213 = sadd.s32 %s212, 1
      %s214 = scalar_select %p211, %s212, %s213
      %p217 = pneg %p211
      %p218 = scmp.eq.s32.totalorder %s24, 1
      %p219 = por %p217, %p218
      %p220 = scmp.ne.s32.totalorder %s212, %s215
      %p221 = scmp.eq.s32.totalorder %s24, 0
      %p222 = por %p220, %p221
      %p223 = scmp.ne.s32.totalorder %s212, %s215
      %p224 = scmp.eq.s32.totalorder %s29, 1
      %p225 = por %p223, %p224
      %p226 = scmp.ne.s32.totalorder %s215, %s216
      %p227 = scmp.eq.s32.totalorder %s29, 0
      %p228 = por %p226, %p227
      %p229 = scmp.ne.s32.totalorder %s215, %s216
      %p230 = scmp.eq.s32.totalorder %s30, 1
      %p231 = por %p229, %p230
      %p233 = scmp.ne.s32.totalorder %s216, %s232
      %p234 = scmp.eq.s32.totalorder %s30, 0
      %p235 = por %p233, %p234
      %s236 = ssub.s32 %s24, %s31
      %p237 = scmp.eq.s32.totalorder %s236, 0
      %s239 = sadd.s32 %s238, 1
      %s240 = scalar_select %p237, %s238, %s239
      %p243 = pneg %p237
      %p244 = scmp.eq.s32.totalorder %s24, 1
      %p245 = por %p243, %p244
      %p246 = scmp.ne.s32.totalorder %s238, %s241
      %p247 = scmp.eq.s32.totalorder %s24, 0
      %p248 = por %p246, %p247
      %p249 = scmp.ne.s32.totalorder %s238, %s241
      %p250 = scmp.eq.s32.totalorder %s29, 1
      %p251 = por %p249, %p250
      %p252 = scmp.ne.s32.totalorder %s241, %s242
      %p253 = scmp.eq.s32.totalorder %s29, 0
      %p254 = por %p252, %p253
      %p255 = scmp.ne.s32.totalorder %s241, %s242
      %p256 = scmp.eq.s32.totalorder %s30, 1
      %p257 = por %p255, %p256
      %p259 = scmp.ne.s32.totalorder %s242, %s258
      %p260 = scmp.eq.s32.totalorder %s30, 0
      %p261 = por %p259, %p260
      %p262 = scmp.le.s32.totalorder 1, %s24
      %p263 = scmp.lt.s32.totalorder %s24, 3
      %p264 = pnand %p262, %p263
      %p265 = pneg %p264
      // Predicated region
      $region9: #{attention_module.1} parent=5 // pred_check
        _
      $region10: #{attention_module.1} parent=5 // pred_check_branch
        %267 = sbr.rel (%p264) target = $region12
      $region11: #{attention_module.1} parent=5 // pred_region
        %s268 = ssub.s32 %s24, 1
        // Predicated region
        $region13: #{attention_module.1} parent=11 // pred_check
          %p269 = pneg %p97
        $region14: #{attention_module.1} parent=11 // pred_check_branch
          %271 = sbr.rel (%p269) target = $region16
        $region15: #{attention_module.1} parent=11 // pred_region
          _
        $region16: #{attention_module.1} parent=11 // pred_fallthru
          _
        // Predicated region
        $region17: #{attention_module.1} parent=11 // pred_check
          %p272 = pneg %p118
        $region18: #{attention_module.1} parent=11 // pred_check_branch
          %274 = sbr.rel (%p272) target = $region20
        $region19: #{attention_module.1} parent=11 // pred_region
          _
        $region20: #{attention_module.1} parent=11 // pred_fallthru
          _
        // Predicated region
        $region21: #{attention_module.1} parent=11 // pred_check
          %p275 = pneg %p139
        $region22: #{attention_module.1} parent=11 // pred_check_branch
          %277 = sbr.rel (%p275) target = $region24
        $region23: #{attention_module.1} parent=11 // pred_region
          _
        $region24: #{attention_module.1} parent=11 // pred_fallthru
          _
        // Predicated region
        $region25: #{attention_module.1} parent=11 // pred_check
          %p278 = pneg %p160
        $region26: #{attention_module.1} parent=11 // pred_check_branch
          %280 = sbr.rel (%p278) target = $region28
        $region27: #{attention_module.1} parent=11 // pred_region
          %s282 = ssub.s32 16, 16
          %283 = vsyncadd [#allocation3], %s282
          %s285 = sshll.u32 [#allocation2], 4
          %s286 = int_to_ptr.vmem [resolvable:$true] %s285
          %288 = dma.hbm_to_vmem [thread:$0]  %s5, 16, %s286, [#allocation3]
        $region28: #{attention_module.1} parent=11 // pred_fallthru
          _
        // Predicated region
        $region29: #{attention_module.1} parent=11 // pred_check
          %p289 = pneg %p181
        $region30: #{attention_module.1} parent=11 // pred_check_branch
          %291 = sbr.rel (%p289) target = $region32
        $region31: #{attention_module.1} parent=11 // pred_region
          %s293 = ssub.s32 16, 16
          %294 = vsyncadd [#allocation6], %s293
          %s296 = sshll.u32 [#allocation5], 4
          %s297 = int_to_ptr.vmem [resolvable:$true] %s296
          %299 = dma.hbm_to_vmem [thread:$0]  %s6, 16, %s297, [#allocation6]
        $region32: #{attention_module.1} parent=11 // pred_fallthru
          _
        // Predicated region
        $region33: #{attention_module.1} parent=11 // pred_check
          %p300 = pneg %p202
        $region34: #{attention_module.1} parent=11 // pred_check_branch
          %302 = sbr.rel (%p300) target = $region36
        $region35: #{attention_module.1} parent=11 // pred_region
          _
        $region36: #{attention_module.1} parent=11 // pred_fallthru
          _
      $region12: #{attention_module.1} parent=5 // pred_fallthru
        _
      %p303 = scmp.lt.s32.totalorder %s24, 2
      // Predicated region
      $region37: #{attention_module.1} parent=5 // pred_check
        %p304 = pneg %p303
      $region38: #{attention_module.1} parent=5 // pred_check_branch
        %306 = sbr.rel (%p304) target = $region40
      $region39: #{attention_module.1} parent=5 // pred_region
        // Predicated region
        $region41: #{attention_module.1} parent=39 // pred_check
          %p307 = pneg %p44
        $region42: #{attention_module.1} parent=39 // pred_check_branch
          %309 = sbr.rel (%p307) target = $region44
        $region43: #{attention_module.1} parent=39 // pred_region
          %s310 = smul.u32 4, %s24
          %p311 = scmp.lt.s32.totalorder %s310, 7
          %s312 = scalar_select %p311, %s310, 7
          %s313 = smul.addr %s312, 8
          %s314 = scalar_lea.vmem %s0, %s313
          %s315 = smul.u32 4, %s24
        $region44: #{attention_module.1} parent=39 // pred_fallthru
          _
        // Predicated region
        $region45: #{attention_module.1} parent=39 // pred_check
          %p316 = pneg %p70
        $region46: #{attention_module.1} parent=39 // pred_check_branch
          %318 = sbr.rel (%p316) target = $region48
        $region47: #{attention_module.1} parent=39 // pred_region
          %s319 = smul.u32 4, %s24
          %p320 = scmp.lt.s32.totalorder %s319, 7
          %s321 = scalar_select %p320, %s319, 7
          %s322 = smul.addr %s321, 8
          %s323 = scalar_lea.vmem %s1, %s322
          %s324 = smul.u32 4, %s24
        $region48: #{attention_module.1} parent=39 // pred_fallthru
          _
      $region40: #{attention_module.1} parent=5 // pred_fallthru
        _
      %p325 = scmp.le.s32.totalorder 1, %s24
      %p326 = scmp.lt.s32.totalorder %s24, 3
      %p327 = pnand %p325, %p326
      %p328 = pneg %p327
      // Predicated region
      $region49: #{attention_module.1} parent=5 // pred_check
        _
      $region50: #{attention_module.1} parent=5 // pred_check_branch
        %330 = sbr.rel (%p327) target = $region52
      $region51: #{attention_module.1} parent=5 // pred_region
        %s331 = ssub.s32 %s24, 1
        // Predicated region
        $region53: #{attention_module.1} parent=51 // pred_check
          %p332 = pneg %p160
        $region54: #{attention_module.1} parent=51 // pred_check_branch
          %334 = sbr.rel (%p332) target = $region56
        $region55: #{attention_module.1} parent=51 // pred_region
          %335 = dma.done [#allocation3], 16
        $region56: #{attention_module.1} parent=51 // pred_fallthru
          _
        // Predicated region
        $region57: #{attention_module.1} parent=51 // pred_check
          %p336 = pneg %p181
        $region58: #{attention_module.1} parent=51 // pred_check_branch
          %338 = sbr.rel (%p336) target = $region60
        $region59: #{attention_module.1} parent=51 // pred_region
          %339 = dma.done [#allocation6], 16
        $region60: #{attention_module.1} parent=51 // pred_fallthru
          _
        %s340 = smul.u32 4, %s29
        %p341 = scmp.lt.s32.totalorder %s340, 7
        %s342 = scalar_select %p341, %s340, 7
        %s343 = smul.addr %s342, 8
        %s344 = scalar_lea.vmem %s0, %s343
        %p345 = pneg %p50
        %p346 = pneg %p47
        %s347 = smul.u32 4, %s29
        %p348 = scmp.lt.s32.totalorder %s347, 7
        %s349 = scalar_select %p348, %s347, 7
        %s350 = smul.addr %s349, 8
        %s351 = scalar_lea.vmem %s1, %s350
        %p352 = pneg %p76
        %p353 = pneg %p73
        %p354 = pneg %p97
        %p355 = pneg %p94
        %p356 = pneg %p118
        %p357 = pneg %p115
        %p358 = pneg %p139
        %p359 = pneg %p136
        %p360 = pneg %p160
        %p361 = pneg %p157
        %p362 = pneg %p181
        %p363 = pneg %p178
        %p364 = pneg %p202
        %p365 = pneg %p199
        %p366 = pneg %p228
        %p367 = pneg %p225
        %s368 = sand.u32 %s215, 1
        %s369 = scalar_lea.sflag [#allocation4], %s368
        %s370 = sand.u32 %s215, 1
        %s371 = smul.addr %s370, 32
        %s372 = scalar_lea.vmem [#allocation7], %s371
        %p373 = pneg %p254
        %p374 = pneg %p251
        %s375 = sand.u32 %s241, 1
        %s376 = scalar_lea.sflag [#allocation9], %s375
        %s377 = sand.u32 %s241, 1
        %s378 = smul.addr %s377, 32
        %s379 = scalar_lea.vmem [#allocation8], %s378
        %s380 = smul.u32 4, %s29
        %p381 = scmp.lt.s32.totalorder %s380, 7
        %s382 = scalar_select %p381, %s380, 7
        %s383 = smul.addr %s382, 8
        %s384 = scalar_lea.vmem %s0, %s383
        %s385 = smul.u32 4, %s29
        %s386 = smul.u32 4, %s29
        %p387 = scmp.lt.s32.totalorder %s386, 7
        %s388 = scalar_select %p387, %s386, 7
        %s389 = smul.addr %s388, 8
        %s390 = scalar_lea.vmem %s1, %s389
        %s391 = smul.u32 4, %s29
        %s392 = smul.u32 4, %s29
        %s393 = smul.u32 4, %s29
        %v395 = vld [vmem:[%s384] sm:$0xff]
        %v396 = vld [vmem:[%s384 + $0x8] sm:$0xff]
        %v397 = vld [vmem:[%s384 + $0x10] sm:$0xff]
        %v398 = vld [vmem:[%s384 + $0x18] sm:$0xff]
        %v399 = vld [vmem:[%s390] sm:$0xff]
        %v400 = vld [vmem:[%s390 + $0x8] sm:$0xff]
        %v401 = vld [vmem:[%s390 + $0x10] sm:$0xff]
        %v402 = vld [vmem:[%s390 + $0x18] sm:$0xff]
        %v403 = vpack.c.bf16 %v396, %v395
        %v404 = vpack.c.bf16 %v398, %v397
        %v405 = vpack.c.bf16 %v400, %v399
        %v406 = vpack.c.bf16 %v402, %v401
        %v407 = vld [vmem:[%s2] sm:$0xf]
        %v408 = vld [vmem:[%s3] sm:$0xf]
        %v409 = vld [vmem:[%s3 + $0x4] sm:$0xf]
        %v410 = vld [vmem:[%s3 + $0x8] sm:$0xf]
        %v411 = vld [vmem:[%s3 + $0xc] sm:$0xf]
        %v412 = vld [vmem:[%s4] sm:$0xf]
        %v413 = vld [vmem:[%s4 + $0x4] sm:$0xf]
        %v414 = vld [vmem:[%s4 + $0x8] sm:$0xf]
        %v415 = vld [vmem:[%s4 + $0xc] sm:$0xf]
        %v416 = vld [vmem:[#allocation2] sm:$0x1]
        %v418 = vlaneseq
        %v419 = vshrl.u32 %v418, 7
        %v420 = vsub.s32 0, %v419
        %v421 = vrot.slane %v416, %v420
        %v423 = vld [vmem:[#allocation5] sm:$0x1]
        %v424 = vld [vmem:[%s7] sm:$0x1]
        %v426 = vlaneseq
        %v427 = vshrl.u32 %v426, 7
        %v428 = vsub.s32 0, %v427
        %v429 = vrot.slane %v423, %v428
        %v435 = vunpack.c.l.b16 %v408
        %v436 = vunpack.c.l.b16 %v409
        %v437 = vunpack.c.l.b16 %v410
        %v438 = vunpack.c.l.b16 %v411
        %v439 = vpack.c.b16 %v436, %v435
        %v440 = vpack.c.b16 %v438, %v437
        %vm443 = vcmask 261120
        %v445 = vsel %vm443, %v403, 0
        %v448 = vsel %vm443, %v404, 0
        %450 = vmatprep.subr.bf16.mxu0 0
        %451 = vmatpush1.bf16.msra.mxu0 %v439
        %452 = vmatprep.subr.bf16.mxu0 0
        %453 = vmatpush1.bf16.msra.mxu0 %v440
        %454 = vmatprep.subr.bf16.mxu0 0
        %455 = vmatpush1.bf16.msra.mxu0 0
        %456 = vmatprep.subr.bf16.mxu0 0
        %457 = vmatpush1.bf16.msra.mxu0 0
        %458 = vmatprep.subr.bf16.mxu0 0
        %459 = vmatpush1.bf16.msra.mxu0 0
        %460 = vmatprep.subr.bf16.mxu0 0
        %461 = vmatpush1.bf16.msra.mxu0 0
        %462 = vmatprep.subr.bf16.mxu0 0
        %463 = vmatpush1.bf16.msra.mxu0 0
        %464 = vmatprep.subr.bf16.mxu0 0
        %465 = vmatpush1.bf16.msra.mxu0 0
        %466 = vmatprep.subr.bf16.mxu0 0
        %467 = vmatpush1.bf16.msra.mxu0 0
        %468 = vmatprep.subr.bf16.mxu0 0
        %469 = vmatpush1.bf16.msra.mxu0 0
        %470 = vmatprep.subr.bf16.mxu0 0
        %471 = vmatpush1.bf16.msra.mxu0 0
        %472 = vmatprep.subr.bf16.mxu0 0
        %473 = vmatpush1.bf16.msra.mxu0 0
        %474 = vmatprep.subr.bf16.mxu0 0
        %475 = vmatpush1.bf16.msra.mxu0 0
        %476 = vmatprep.subr.bf16.mxu0 0
        %477 = vmatpush1.bf16.msra.mxu0 0
        %478 = vmatprep.subr.bf16.mxu0 0
        %479 = vmatpush1.bf16.msra.mxu0 0
        %480 = vmatprep.subr.bf16.mxu0 0
        %481 = vmatpush1.bf16.msra.mxu0 0
        %482 = vmatprep.mubr.bf16.mxu0 0
        %483 = vmatmul.mubr.bf16.gmra.mrb[0].mxu0 %v445
        %v484 = vpop.f32.mrb[0].mxu0
        %v485 = vadd.f32 %v429, %v484
        %v486 = vpop.f32.mrb[0].mxu0
        %v487 = vpop.f32.mrb[0].mxu0
        %v488 = vadd.f32 %v429, %v487
        %v489 = vpop.f32.mrb[0].mxu0
        %490 = vmatprep.mubr.bf16.mxu0 0
        %491 = vmatmul.mubr.bf16.gmra.mrb[0].mxu0 %v448
        %v492 = vpop.f32.mrb[0].mxu0
        %v493 = vadd.f32 %v429, %v492
        %v494 = vpop.f32.mrb[0].mxu0
        %v495 = vpop.f32.mrb[0].mxu0
        %v496 = vadd.f32 %v429, %v495
        %v497 = vpop.f32.mrb[0].mxu0
        %498 = vdwg.mxu0
        %v500 = vlaneseq
        %v501 = vshrl.u32 %v500, 7
        %v502 = vsub.s32 0, %v501
        %v503 = vrot.slane %v424, %v502
        %v509 = vunpack.c.l.b16 %v412
        %v510 = vunpack.c.l.b16 %v413
        %v511 = vunpack.c.l.b16 %v414
        %v512 = vunpack.c.l.b16 %v415
        %v513 = vpack.c.b16 %v510, %v509
        %v514 = vpack.c.b16 %v512, %v511
        %v518 = vsel %vm443, %v405, 0
        %v521 = vsel %vm443, %v406, 0
        %523 = vmatprep.subr.bf16.mxu0 0
        %524 = vmatpush1.bf16.msra.mxu0 %v513
        %525 = vmatprep.subr.bf16.mxu0 0
        %526 = vmatpush1.bf16.msra.mxu0 %v514
        %527 = vmatprep.subr.bf16.mxu0 0
        %528 = vmatpush1.bf16.msra.mxu0 0
        %529 = vmatprep.subr.bf16.mxu0 0
        %530 = vmatpush1.bf16.msra.mxu0 0
        %531 = vmatprep.subr.bf16.mxu0 0
        %532 = vmatpush1.bf16.msra.mxu0 0
        %533 = vmatprep.subr.bf16.mxu0 0
        %534 = vmatpush1.bf16.msra.mxu0 0
        %535 = vmatprep.subr.bf16.mxu0 0
        %536 = vmatpush1.bf16.msra.mxu0 0
        %537 = vmatprep.subr.bf16.mxu0 0
        %538 = vmatpush1.bf16.msra.mxu0 0
        %539 = vmatprep.subr.bf16.mxu0 0
        %540 = vmatpush1.bf16.msra.mxu0 0
        %541 = vmatprep.subr.bf16.mxu0 0
        %542 = vmatpush1.bf16.msra.mxu0 0
        %543 = vmatprep.subr.bf16.mxu0 0
        %544 = vmatpush1.bf16.msra.mxu0 0
        %545 = vmatprep.subr.bf16.mxu0 0
        %546 = vmatpush1.bf16.msra.mxu0 0
        %547 = vmatprep.subr.bf16.mxu0 0
        %548 = vmatpush1.bf16.msra.mxu0 0
        %549 = vmatprep.subr.bf16.mxu0 0
        %550 = vmatpush1.bf16.msra.mxu0 0
        %551 = vmatprep.subr.bf16.mxu0 0
        %552 = vmatpush1.bf16.msra.mxu0 0
        %553 = vmatprep.subr.bf16.mxu0 0
        %554 = vmatpush1.bf16.msra.mxu0 0
        %555 = vmatprep.mubr.bf16.mxu0 0
        %556 = vmatmul.mubr.bf16.gmra.mrb[0].mxu0 %v518
        %v557 = vpop.f32.mrb[0].mxu0
        %v558 = vadd.f32 %v503, %v557
        %v559 = vpop.f32.mrb[0].mxu0
        %v560 = vpop.f32.mrb[0].mxu0
        %v561 = vadd.f32 %v503, %v560
        %v562 = vpop.f32.mrb[0].mxu0
        %563 = vmatprep.mubr.bf16.mxu0 0
        %564 = vmatmul.mubr.bf16.gmra.mrb[0].mxu0 %v521
        %v565 = vpop.f32.mrb[0].mxu0
        %v566 = vadd.f32 %v503, %v565
        %v567 = vpop.f32.mrb[0].mxu0
        %v568 = vpop.f32.mrb[0].mxu0
        %v569 = vadd.f32 %v503, %v568
        %v570 = vpop.f32.mrb[0].mxu0
        %571 = vdwg.mxu0
        %v572 = vpack.c.bf16 %v488, %v485
        %v573 = vpack.c.bf16 %v496, %v493
        %v574 = vpack.c.bf16 %v561, %v558
        %v575 = vpack.c.bf16 %v569, %v566
        %576 = vxpose.xlu0.c.b16.start [1/8] %v403, 128
        %577 = vxpose.xlu0.c.b16.cont [2/8] 0, 128
        %578 = vxpose.xlu0.c.b16.cont [3/8] 0, 128
        %579 = vxpose.xlu0.c.b16.cont [4/8] 0, 128
        %580 = vxpose.xlu0.c.b16.cont [5/8] 0, 128
        %581 = vxpose.xlu0.c.b16.cont [6/8] 0, 128
        %582 = vxpose.xlu0.c.b16.cont [7/8] 0, 128
        %583 = vxpose.xlu0.c.b16.end [8/8] 0, 128
        %v584 = vpop.trf.xlu0
        %v585 = vpop.trf.xlu0
        %v586 = vpop.trf.xlu0
        %v587 = vpop.trf.xlu0
        %v588 = vpop.trf.xlu0
        %v589 = vpop.trf.xlu0
        %v590 = vpop.trf.xlu0
        %v591 = vpop.trf.xlu0
        %vm592 = vcmask 64512
        %v594 = vsel %vm592, %v584, 0
        %v597 = vsel %vm592, %v585, 0
        %vm599 = vcmask 1043456
        %v601 = vsel %vm599, %v407, 0
        %603 = vmatprep.subr.bf16.mxu0 0
        %604 = vmatpush1.bf16.msra.mxu0 %v601
        %605 = vmatprep.subr.bf16.mxu0 0
        %606 = vmatpush1.bf16.msra.mxu0 0
        %607 = vmatprep.subr.bf16.mxu0 0
        %608 = vmatpush1.bf16.msra.mxu0 0
        %609 = vmatprep.subr.bf16.mxu0 0
        %610 = vmatpush1.bf16.msra.mxu0 0
        %611 = vmatprep.subr.bf16.mxu0 0
        %612 = vmatpush1.bf16.msra.mxu0 0
        %613 = vmatprep.subr.bf16.mxu0 0
        %614 = vmatpush1.bf16.msra.mxu0 0
        %615 = vmatprep.subr.bf16.mxu0 0
        %616 = vmatpush1.bf16.msra.mxu0 0
        %617 = vmatprep.subr.bf16.mxu0 0
        %618 = vmatpush1.bf16.msra.mxu0 0
        %619 = vmatprep.subr.bf16.mxu0 0
        %620 = vmatpush1.bf16.msra.mxu0 0
        %621 = vmatprep.subr.bf16.mxu0 0
        %622 = vmatpush1.bf16.msra.mxu0 0
        %623 = vmatprep.subr.bf16.mxu0 0
        %624 = vmatpush1.bf16.msra.mxu0 0
        %625 = vmatprep.subr.bf16.mxu0 0
        %626 = vmatpush1.bf16.msra.mxu0 0
        %627 = vmatprep.subr.bf16.mxu0 0
        %628 = vmatpush1.bf16.msra.mxu0 0
        %629 = vmatprep.subr.bf16.mxu0 0
        %630 = vmatpush1.bf16.msra.mxu0 0
        %631 = vmatprep.subr.bf16.mxu0 0
        %632 = vmatpush1.bf16.msra.mxu0 0
        %633 = vmatprep.subr.bf16.mxu0 0
        %634 = vmatpush1.bf16.msra.mxu0 0
        %635 = vmatprep.mubr.bf16.mxu0 0
        %636 = vmatmul.mubr.bf16.gmra.mrb[0].mxu0 %v594
        %v637 = vpop.f32.mrb[0].mxu0
        %v638 = vadd.f32 %v421, %v637
        %v639 = vpop.f32.mrb[0].mxu0
        %v640 = vpop.f32.mrb[0].mxu0
        %v641 = vadd.f32 %v421, %v640
        %v642 = vpop.f32.mrb[0].mxu0
        %643 = vmatprep.mubr.bf16.mxu0 0
        %644 = vmatmul.mubr.bf16.gmra.mrb[0].mxu0 %v597
        %v645 = vpop.f32.mrb[0].mxu0
        %v646 = vadd.f32 %v421, %v645
        %v647 = vpop.f32.mrb[0].mxu0
        %v648 = vpop.f32.mrb[0].mxu0
        %v649 = vadd.f32 %v421, %v648
        %v650 = vpop.f32.mrb[0].mxu0
        %651 = vdwg.mxu0
        %v652 = vpack.c.bf16 %v641, %v638
        %v653 = vpack.c.bf16 %v649, %v646
        %v655 = vsel %vm592, %v652, 0
        %v658 = vsel %vm592, %v653, 0
        %v660 = vsel %vm599, %v405, 0
        %662 = vmatprep.subr.bf16.mxu0 0
        %663 = vmatpush1.bf16.msra.mxu0 %v660
        %664 = vmatprep.subr.bf16.mxu0 0
        %665 = vmatpush1.bf16.msra.mxu0 0
        %666 = vmatprep.subr.bf16.mxu0 0
        %667 = vmatpush1.bf16.msra.mxu0 0
        %668 = vmatprep.subr.bf16.mxu0 0
        %669 = vmatpush1.bf16.msra.mxu0 0
        %670 = vmatprep.subr.bf16.mxu0 0
        %671 = vmatpush1.bf16.msra.mxu0 0
        %672 = vmatprep.subr.bf16.mxu0 0
        %673 = vmatpush1.bf16.msra.mxu0 0
        %674 = vmatprep.subr.bf16.mxu0 0
        %675 = vmatpush1.bf16.msra.mxu0 0
        %676 = vmatprep.subr.bf16.mxu0 0
        %677 = vmatpush1.bf16.msra.mxu0 0
        %678 = vmatprep.subr.bf16.mxu0 0
        %679 = vmatpush1.bf16.msra.mxu0 0
        %680 = vmatprep.subr.bf16.mxu0 0
        %681 = vmatpush1.bf16.msra.mxu0 0
        %682 = vmatprep.subr.bf16.mxu0 0
        %683 = vmatpush1.bf16.msra.mxu0 0
        %684 = vmatprep.subr.bf16.mxu0 0
        %685 = vmatpush1.bf16.msra.mxu0 0
        %686 = vmatprep.subr.bf16.mxu0 0
        %687 = vmatpush1.bf16.msra.mxu0 0
        %688 = vmatprep.subr.bf16.mxu0 0
        %689 = vmatpush1.bf16.msra.mxu0 0
        %690 = vmatprep.subr.bf16.mxu0 0
        %691 = vmatpush1.bf16.msra.mxu0 0
        %692 = vmatprep.subr.bf16.mxu0 0
        %693 = vmatpush1.bf16.msra.mxu0 0
        %694 = vmatprep.mubr.bf16.mxu0 0
        %695 = vmatmul.mubr.bf16.gmra.mrb[0].mxu0 %v655
        %v696 = vpop.f32.mrb[0].mxu0
        %v697 = vadd.f32 0.0, %v696
        %v698 = vpop.f32.mrb[0].mxu0
        %v699 = vpop.f32.mrb[0].mxu0
        %v700 = vadd.f32 0.0, %v699
        %v701 = vpop.f32.mrb[0].mxu0
        %702 = vmatprep.mubr.bf16.mxu0 0
        %703 = vmatmul.mubr.bf16.gmra.mrb[0].mxu0 %v658
        %v704 = vpop.f32.mrb[0].mxu0
        %v705 = vadd.f32 0.0, %v704
        %v706 = vpop.f32.mrb[0].mxu0
        %v707 = vpop.f32.mrb[0].mxu0
        %v708 = vadd.f32 0.0, %v707
        %v709 = vpop.f32.mrb[0].mxu0
        %710 = vdwg.mxu0
        %v711 = vtanh.pop %v697
        %v712 = vtanh.pop %v700
        %v713 = vtanh.pop %v705
        %v714 = vtanh.pop %v708
        %v715 = vpack.c.bf16 %v712, %v711
        %v716 = vpack.c.bf16 %v714, %v713
        %v718 = vsel %vm443, %v574, 0
        %v721 = vsel %vm443, %v715, 0
        %v724 = vsel %vm443, %v716, 0
        %726 = vmatprep.subr.bf16.mxu0 0
        %727 = vmatpush1.bf16.xpose.msra.mxu0 %v721
        %728 = vmatprep.subr.bf16.mxu0 0
        %729 = vmatpush1.bf16.xpose.msra.mxu0 %v724
        %730 = vmatprep.subr.bf16.mxu0 0
        %731 = vmatpush1.bf16.xpose.msra.mxu0 0
        %732 = vmatprep.subr.bf16.mxu0 0
        %733 = vmatpush1.bf16.xpose.msra.mxu0 0
        %734 = vmatprep.subr.bf16.mxu0 0
        %735 = vmatpush1.bf16.xpose.msra.mxu0 0
        %736 = vmatprep.subr.bf16.mxu0 0
        %737 = vmatpush1.bf16.xpose.msra.mxu0 0
        %738 = vmatprep.subr.bf16.mxu0 0
        %739 = vmatpush1.bf16.xpose.msra.mxu0 0
        %740 = vmatprep.subr.bf16.mxu0 0
        %741 = vmatpush1.bf16.xpose.msra.mxu0 0
        %742 = vmatprep.subr.bf16.mxu0 0
        %743 = vmatpush1.bf16.xpose.msra.mxu0 0
        %744 = vmatprep.subr.bf16.mxu0 0
        %745 = vmatpush1.bf16.xpose.msra.mxu0 0
        %746 = vmatprep.subr.bf16.mxu0 0
        %747 = vmatpush1.bf16.xpose.msra.mxu0 0
        %748 = vmatprep.subr.bf16.mxu0 0
        %749 = vmatpush1.bf16.xpose.msra.mxu0 0
        %750 = vmatprep.subr.bf16.mxu0 0
        %751 = vmatpush1.bf16.xpose.msra.mxu0 0
        %752 = vmatprep.subr.bf16.mxu0 0
        %753 = vmatpush1.bf16.xpose.msra.mxu0 0
        %754 = vmatprep.subr.bf16.mxu0 0
        %755 = vmatpush1.bf16.xpose.msra.mxu0 0
        %756 = vmatprep.subr.bf16.mxu0 0
        %757 = vmatpush1.bf16.xpose.msra.mxu0 0
        %758 = vmatprep.mubr.bf16.mxu0 0
        %759 = vmatmul.mubr.bf16.gmra.mrb[0].mxu0 %v718
        %v760 = vpop.f32.mrb[0].mxu0
        %v761 = vadd.f32 0.0, %v760
        %v762 = vpop.f32.mrb[0].mxu0
        %v763 = vpop.f32.mrb[0].mxu0
        %v764 = vpop.f32.mrb[0].mxu0
        %765 = vdwg.mxu0
        %v766 = vadd.f32 %v485, %v761
        %v767 = vtanh.pop %v766
        %v769 = vsel %vm443, %v572, 0
        %771 = vmatprep.subr.bf16.mxu0 0
        %772 = vmatpush1.bf16.msra.mxu0 %v715
        %773 = vmatprep.subr.bf16.mxu0 0
        %774 = vmatpush1.bf16.msra.mxu0 %v716
        %775 = vmatprep.subr.bf16.mxu0 0
        %776 = vmatpush1.bf16.msra.mxu0 0
        %777 = vmatprep.subr.bf16.mxu0 0
        %778 = vmatpush1.bf16.msra.mxu0 0
        %779 = vmatprep.subr.bf16.mxu0 0
        %780 = vmatpush1.bf16.msra.mxu0 0
        %781 = vmatprep.subr.bf16.mxu0 0
        %782 = vmatpush1.bf16.msra.mxu0 0
        %783 = vmatprep.subr.bf16.mxu0 0
        %784 = vmatpush1.bf16.msra.mxu0 0
        %785 = vmatprep.subr.bf16.mxu0 0
        %786 = vmatpush1.bf16.msra.mxu0 0
        %787 = vmatprep.subr.bf16.mxu0 0
        %788 = vmatpush1.bf16.msra.mxu0 0
        %789 = vmatprep.subr.bf16.mxu0 0
        %790 = vmatpush1.bf16.msra.mxu0 0
        %791 = vmatprep.subr.bf16.mxu0 0
        %792 = vmatpush1.bf16.msra.mxu0 0
        %793 = vmatprep.subr.bf16.mxu0 0
        %794 = vmatpush1.bf16.msra.mxu0 0
        %795 = vmatprep.subr.bf16.mxu0 0
        %796 = vmatpush1.bf16.msra.mxu0 0
        %797 = vmatprep.subr.bf16.mxu0 0
        %798 = vmatpush1.bf16.msra.mxu0 0
        %799 = vmatprep.subr.bf16.mxu0 0
        %800 = vmatpush1.bf16.msra.mxu0 0
        %801 = vmatprep.subr.bf16.mxu0 0
        %802 = vmatpush1.bf16.msra.mxu0 0
        %803 = vmatprep.mubr.bf16.mxu0 0
        %804 = vmatmul.mubr.bf16.gmra.mrb[0].mxu0 %v769
        %v805 = vpop.f32.mrb[0].mxu0
        %v806 = vadd.f32 %v558, %v805
        %v807 = vpop.f32.mrb[0].mxu0
        %v808 = vpop.f32.mrb[0].mxu0
        %v809 = vpop.f32.mrb[0].mxu0
        %810 = vdwg.mxu0
        %v811 = vtanh.pop %v806
        %v812 = vsel %vm443, %v767, -inf
        %813 = vmax.xlane.f32.xlu0 %v812
        %v814 = vpop.xlane.xlu0 %813
        %v815 = vsub.f32 %v767, %v814
        %v816 = vmul.f32 %v815, 1.442695
        %v817 = vpow.pop %v816
        %v818 = vsel %vm443, %v817, 0.0
        %819 = vadd.xlane.f32.xlu0 %v818
        %v820 = vpop.xlane.xlu0 %819
        %v821 = vrcp.pop %v820
        %v822 = vmul.f32 %v817, %v821
        %v823 = vmul.f32 %v822, %v395
        %824 = vst.msk [vmem:[%s372] sm:$0xff] %vm443, %v823
        %v825 = vsel %vm443, %v811, -inf
        %826 = vmax.xlane.f32.xlu0 %v825
        %v827 = vpop.xlane.xlu0 %826
        %v828 = vsub.f32 %v811, %v827
        %v829 = vmul.f32 %v828, 1.442695
        %v830 = vpow.pop %v829
        %v831 = vsel %vm443, %v830, 0.0
        %832 = vadd.xlane.f32.xlu0 %v831
        %v833 = vpop.xlane.xlu0 %832
        %v834 = vrcp.pop %v833
        %v835 = vmul.f32 %v830, %v834
        %v836 = vmul.f32 %v835, %v399
        %837 = vst.msk [vmem:[%s379] sm:$0xff] %vm443, %v836
        %v839 = vrot.slane %v403, 4
        %841 = vxpose.xlu0.c.b16.start [1/8] %v839, 128
        %842 = vxpose.xlu0.c.b16.cont [2/8] 0, 128
        %843 = vxpose.xlu0.c.b16.cont [3/8] 0, 128
        %844 = vxpose.xlu0.c.b16.cont [4/8] 0, 128
        %845 = vxpose.xlu0.c.b16.cont [5/8] 0, 128
        %846 = vxpose.xlu0.c.b16.cont [6/8] 0, 128
        %847 = vxpose.xlu0.c.b16.cont [7/8] 0, 128
        %848 = vxpose.xlu0.c.b16.end [8/8] 0, 128
        %v849 = vpop.trf.xlu0
        %v850 = vpop.trf.xlu0
        %v851 = vpop.trf.xlu0
        %v852 = vpop.trf.xlu0
        %v853 = vpop.trf.xlu0
        %v854 = vpop.trf.xlu0
        %v855 = vpop.trf.xlu0
        %v856 = vpop.trf.xlu0
        %v858 = vsel %vm592, %v849, 0
        %v861 = vsel %vm592, %v850, 0
        %863 = vmatprep.subr.bf16.mxu0 0
        %864 = vmatpush1.bf16.msra.mxu0 %v601
        %865 = vmatprep.subr.bf16.mxu0 0
        %866 = vmatpush1.bf16.msra.mxu0 0
        %867 = vmatprep.subr.bf16.mxu0 0
        %868 = vmatpush1.bf16.msra.mxu0 0
        %869 = vmatprep.subr.bf16.mxu0 0
        %870 = vmatpush1.bf16.msra.mxu0 0
        %871 = vmatprep.subr.bf16.mxu0 0
        %872 = vmatpush1.bf16.msra.mxu0 0
        %873 = vmatprep.subr.bf16.mxu0 0
        %874 = vmatpush1.bf16.msra.mxu0 0
        %875 = vmatprep.subr.bf16.mxu0 0
        %876 = vmatpush1.bf16.msra.mxu0 0
        %877 = vmatprep.subr.bf16.mxu0 0
        %878 = vmatpush1.bf16.msra.mxu0 0
        %879 = vmatprep.subr.bf16.mxu0 0
        %880 = vmatpush1.bf16.msra.mxu0 0
        %881 = vmatprep.subr.bf16.mxu0 0
        %882 = vmatpush1.bf16.msra.mxu0 0
        %883 = vmatprep.subr.bf16.mxu0 0
        %884 = vmatpush1.bf16.msra.mxu0 0
        %885 = vmatprep.subr.bf16.mxu0 0
        %886 = vmatpush1.bf16.msra.mxu0 0
        %887 = vmatprep.subr.bf16.mxu0 0
        %888 = vmatpush1.bf16.msra.mxu0 0
        %889 = vmatprep.subr.bf16.mxu0 0
        %890 = vmatpush1.bf16.msra.mxu0 0
        %891 = vmatprep.subr.bf16.mxu0 0
        %892 = vmatpush1.bf16.msra.mxu0 0
        %893 = vmatprep.subr.bf16.mxu0 0
        %894 = vmatpush1.bf16.msra.mxu0 0
        %895 = vmatprep.mubr.bf16.mxu0 0
        %896 = vmatmul.mubr.bf16.gmra.mrb[0].mxu0 %v858
        %v897 = vpop.f32.mrb[0].mxu0
        %v898 = vadd.f32 %v421, %v897
        %v899 = vpop.f32.mrb[0].mxu0
        %v900 = vpop.f32.mrb[0].mxu0
        %v901 = vadd.f32 %v421, %v900
        %v902 = vpop.f32.mrb[0].mxu0
        %903 = vmatprep.mubr.bf16.mxu0 0
        %904 = vmatmul.mubr.bf16.gmra.mrb[0].mxu0 %v861
        %v905 = vpop.f32.mrb[0].mxu0
        %v906 = vadd.f32 %v421, %v905
        %v907 = vpop.f32.mrb[0].mxu0
        %v908 = vpop.f32.mrb[0].mxu0
        %v909 = vadd.f32 %v421, %v908
        %v910 = vpop.f32.mrb[0].mxu0
        %911 = vdwg.mxu0
        %v912 = vpack.c.bf16 %v901, %v898
        %v913 = vpack.c.bf16 %v909, %v906
        %v915 = vrot.slane %v405, 4
        %v917 = vsel %vm592, %v912, 0
        %v920 = vsel %vm592, %v913, 0
        %v923 = vsel %vm599, %v915, 0
        %925 = vmatprep.subr.bf16.mxu0 0
        %926 = vmatpush1.bf16.msra.mxu0 %v923
        %927 = vmatprep.subr.bf16.mxu0 0
        %928 = vmatpush1.bf16.msra.mxu0 0
        %929 = vmatprep.subr.bf16.mxu0 0
        %930 = vmatpush1.bf16.msra.mxu0 0
        %931 = vmatprep.subr.bf16.mxu0 0
        %932 = vmatpush1.bf16.msra.mxu0 0
        %933 = vmatprep.subr.bf16.mxu0 0
        %934 = vmatpush1.bf16.msra.mxu0 0
        %935 = vmatprep.subr.bf16.mxu0 0
        %936 = vmatpush1.bf16.msra.mxu0 0
        %937 = vmatprep.subr.bf16.mxu0 0
        %938 = vmatpush1.bf16.msra.mxu0 0
        %939 = vmatprep.subr.bf16.mxu0 0
        %940 = vmatpush1.bf16.msra.mxu0 0
        %941 = vmatprep.subr.bf16.mxu0 0
        %942 = vmatpush1.bf16.msra.mxu0 0
        %943 = vmatprep.subr.bf16.mxu0 0
        %944 = vmatpush1.bf16.msra.mxu0 0
        %945 = vmatprep.subr.bf16.mxu0 0
        %946 = vmatpush1.bf16.msra.mxu0 0
        %947 = vmatprep.subr.bf16.mxu0 0
        %948 = vmatpush1.bf16.msra.mxu0 0
        %949 = vmatprep.subr.bf16.mxu0 0
        %950 = vmatpush1.bf16.msra.mxu0 0
        %951 = vmatprep.subr.bf16.mxu0 0
        %952 = vmatpush1.bf16.msra.mxu0 0
        %953 = vmatprep.subr.bf16.mxu0 0
        %954 = vmatpush1.bf16.msra.mxu0 0
        %955 = vmatprep.subr.bf16.mxu0 0
        %956 = vmatpush1.bf16.msra.mxu0 0
        %957 = vmatprep.mubr.bf16.mxu0 0
        %958 = vmatmul.mubr.bf16.gmra.mrb[0].mxu0 %v917
        %v959 = vpop.f32.mrb[0].mxu0
        %v960 = vadd.f32 0.0, %v959
        %v961 = vpop.f32.mrb[0].mxu0
        %v962 = vpop.f32.mrb[0].mxu0
        %v963 = vadd.f32 0.0, %v962
        %v964 = vpop.f32.mrb[0].mxu0
        %965 = vmatprep.mubr.bf16.mxu0 0
        %966 = vmatmul.mubr.bf16.gmra.mrb[0].mxu0 %v920
        %v967 = vpop.f32.mrb[0].mxu0
        %v968 = vadd.f32 0.0, %v967
        %v969 = vpop.f32.mrb[0].mxu0
        %v970 = vpop.f32.mrb[0].mxu0
        %v971 = vadd.f32 0.0, %v970
        %v972 = vpop.f32.mrb[0].mxu0
        %973 = vdwg.mxu0
        %v974 = vtanh.pop %v960
        %v975 = vtanh.pop %v963
        %v976 = vtanh.pop %v968
        %v977 = vtanh.pop %v971
        %v978 = vpack.c.bf16 %v975, %v974
        %v979 = vpack.c.bf16 %v977, %v976
        %v981 = vrot.slane %v574, 4
        %v983 = vsel %vm443, %v981, 0
        %v986 = vsel %vm443, %v978, 0
        %v989 = vsel %vm443, %v979, 0
        %991 = vmatprep.subr.bf16.mxu0 0
        %992 = vmatpush1.bf16.xpose.msra.mxu0 %v986
        %993 = vmatprep.subr.bf16.mxu0 0
        %994 = vmatpush1.bf16.xpose.msra.mxu0 %v989
        %995 = vmatprep.subr.bf16.mxu0 0
        %996 = vmatpush1.bf16.xpose.msra.mxu0 0
        %997 = vmatprep.subr.bf16.mxu0 0
        %998 = vmatpush1.bf16.xpose.msra.mxu0 0
        %999 = vmatprep.subr.bf16.mxu0 0
        %1000 = vmatpush1.bf16.xpose.msra.mxu0 0
        %1001 = vmatprep.subr.bf16.mxu0 0
        %1002 = vmatpush1.bf16.xpose.msra.mxu0 0
        %1003 = vmatprep.subr.bf16.mxu0 0
        %1004 = vmatpush1.bf16.xpose.msra.mxu0 0
        %1005 = vmatprep.subr.bf16.mxu0 0
        %1006 = vmatpush1.bf16.xpose.msra.mxu0 0
        %1007 = vmatprep.subr.bf16.mxu0 0
        %1008 = vmatpush1.bf16.xpose.msra.mxu0 0
        %1009 = vmatprep.subr.bf16.mxu0 0
        %1010 = vmatpush1.bf16.xpose.msra.mxu0 0
        %1011 = vmatprep.subr.bf16.mxu0 0
        %1012 = vmatpush1.bf16.xpose.msra.mxu0 0
        %1013 = vmatprep.subr.bf16.mxu0 0
        %1014 = vmatpush1.bf16.xpose.msra.mxu0 0
        %1015 = vmatprep.subr.bf16.mxu0 0
        %1016 = vmatpush1.bf16.xpose.msra.mxu0 0
        %1017 = vmatprep.subr.bf16.mxu0 0
        %1018 = vmatpush1.bf16.xpose.msra.mxu0 0
        %1019 = vmatprep.subr.bf16.mxu0 0
        %1020 = vmatpush1.bf16.xpose.msra.mxu0 0
        %1021 = vmatprep.subr.bf16.mxu0 0
        %1022 = vmatpush1.bf16.xpose.msra.mxu0 0
        %1023 = vmatprep.mubr.bf16.mxu0 0
        %1024 = vmatmul.mubr.bf16.gmra.mrb[0].mxu0 %v983
        %v1025 = vpop.f32.mrb[0].mxu0
        %v1026 = vadd.f32 0.0, %v1025
        %v1027 = vpop.f32.mrb[0].mxu0
        %v1028 = vpop.f32.mrb[0].mxu0
        %v1029 = vpop.f32.mrb[0].mxu0
        %1030 = vdwg.mxu0
        %v1031 = vadd.f32 %v488, %v1026
        %v1032 = vtanh.pop %v1031
        %v1034 = vrot.slane %v572, 4
        %v1036 = vsel %vm443, %v1034, 0
        %1038 = vmatprep.subr.bf16.mxu0 0
        %1039 = vmatpush1.bf16.msra.mxu0 %v978
        %1040 = vmatprep.subr.bf16.mxu0 0
        %1041 = vmatpush1.bf16.msra.mxu0 %v979
        %1042 = vmatprep.subr.bf16.mxu0 0
        %1043 = vmatpush1.bf16.msra.mxu0 0
        %1044 = vmatprep.subr.bf16.mxu0 0
        %1045 = vmatpush1.bf16.msra.mxu0 0
        %1046 = vmatprep.subr.bf16.mxu0 0
        %1047 = vmatpush1.bf16.msra.mxu0 0
        %1048 = vmatprep.subr.bf16.mxu0 0
        %1049 = vmatpush1.bf16.msra.mxu0 0
        %1050 = vmatprep.subr.bf16.mxu0 0
        %1051 = vmatpush1.bf16.msra.mxu0 0
        %1052 = vmatprep.subr.bf16.mxu0 0
        %1053 = vmatpush1.bf16.msra.mxu0 0
        %1054 = vmatprep.subr.bf16.mxu0 0
        %1055 = vmatpush1.bf16.msra.mxu0 0
        %1056 = vmatprep.subr.bf16.mxu0 0
        %1057 = vmatpush1.bf16.msra.mxu0 0
        %1058 = vmatprep.subr.bf16.mxu0 0
        %1059 = vmatpush1.bf16.msra.mxu0 0
        %1060 = vmatprep.subr.bf16.mxu0 0
        %1061 = vmatpush1.bf16.msra.mxu0 0
        %1062 = vmatprep.subr.bf16.mxu0 0
        %1063 = vmatpush1.bf16.msra.mxu0 0
        %1064 = vmatprep.subr.bf16.mxu0 0
        %1065 = vmatpush1.bf16.msra.mxu0 0
        %1066 = vmatprep.subr.bf16.mxu0 0
        %1067 = vmatpush1.bf16.msra.mxu0 0
        %1068 = vmatprep.subr.bf16.mxu0 0
        %1069 = vmatpush1.bf16.msra.mxu0 0
        %1070 = vmatprep.mubr.bf16.mxu0 0
        %1071 = vmatmul.mubr.bf16.gmra.mrb[0].mxu0 %v1036
        %v1072 = vpop.f32.mrb[0].mxu0
        %v1073 = vadd.f32 %v561, %v1072
        %v1074 = vpop.f32.mrb[0].mxu0
        %v1075 = vpop.f32.mrb[0].mxu0
        %v1076 = vpop.f32.mrb[0].mxu0
        %1077 = vdwg.mxu0
        %v1078 = vtanh.pop %v1073
        %v1079 = vsel %vm443, %v1032, -inf
        %1080 = vmax.xlane.f32.xlu0 %v1079
        %v1081 = vpop.xlane.xlu0 %1080
        %v1082 = vsub.f32 %v1032, %v1081
        %v1083 = vmul.f32 %v1082, 1.442695
        %v1084 = vpow.pop %v1083
        %v1085 = vsel %vm443, %v1084, 0.0
        %1086 = vadd.xlane.f32.xlu0 %v1085
        %v1087 = vpop.xlane.xlu0 %1086
        %v1088 = vrcp.pop %v1087
        %v1089 = vmul.f32 %v1084, %v1088
        %v1090 = vmul.f32 %v1089, %v396
        %1091 = vst.msk [vmem:[%s372 + $0x8] sm:$0xff] %vm443, %v1090
        %v1092 = vsel %vm443, %v1078, -inf
        %1093 = vmax.xlane.f32.xlu0 %v1092
        %v1094 = vpop.xlane.xlu0 %1093
        %v1095 = vsub.f32 %v1078, %v1094
        %v1096 = vmul.f32 %v1095, 1.442695
        %v1097 = vpow.pop %v1096
        %v1098 = vsel %vm443, %v1097, 0.0
        %1099 = vadd.xlane.f32.xlu0 %v1098
        %v1100 = vpop.xlane.xlu0 %1099
        %v1101 = vrcp.pop %v1100
        %v1102 = vmul.f32 %v1097, %v1101
        %v1103 = vmul.f32 %v1102, %v400
        %1104 = vst.msk [vmem:[%s379 + $0x8] sm:$0xff] %vm443, %v1103
        %1105 = vxpose.xlu0.c.b16.start [1/8] %v404, 128
        %1106 = vxpose.xlu0.c.b16.cont [2/8] 0, 128
        %1107 = vxpose.xlu0.c.b16.cont [3/8] 0, 128
        %1108 = vxpose.xlu0.c.b16.cont [4/8] 0, 128
        %1109 = vxpose.xlu0.c.b16.cont [5/8] 0, 128
        %1110 = vxpose.xlu0.c.b16.cont [6/8] 0, 128
        %1111 = vxpose.xlu0.c.b16.cont [7/8] 0, 128
        %1112 = vxpose.xlu0.c.b16.end [8/8] 0, 128
        %v1113 = vpop.trf.xlu0
        %v1114 = vpop.trf.xlu0
        %v1115 = vpop.trf.xlu0
        %v1116 = vpop.trf.xlu0
        %v1117 = vpop.trf.xlu0
        %v1118 = vpop.trf.xlu0
        %v1119 = vpop.trf.xlu0
        %v1120 = vpop.trf.xlu0
        %v1122 = vsel %vm592, %v1113, 0
        %v1125 = vsel %vm592, %v1114, 0
        %1127 = vmatprep.subr.bf16.mxu0 0
        %1128 = vmatpush1.bf16.msra.mxu0 %v601
        %1129 = vmatprep.subr.bf16.mxu0 0
        %1130 = vmatpush1.bf16.msra.mxu0 0
        %1131 = vmatprep.subr.bf16.mxu0 0
        %1132 = vmatpush1.bf16.msra.mxu0 0
        %1133 = vmatprep.subr.bf16.mxu0 0
        %1134 = vmatpush1.bf16.msra.mxu0 0
        %1135 = vmatprep.subr.bf16.mxu0 0
        %1136 = vmatpush1.bf16.msra.mxu0 0
        %1137 = vmatprep.subr.bf16.mxu0 0
        %1138 = vmatpush1.bf16.msra.mxu0 0
        %1139 = vmatprep.subr.bf16.mxu0 0
        %1140 = vmatpush1.bf16.msra.mxu0 0
        %1141 = vmatprep.subr.bf16.mxu0 0
        %1142 = vmatpush1.bf16.msra.mxu0 0
        %1143 = vmatprep.subr.bf16.mxu0 0
        %1144 = vmatpush1.bf16.msra.mxu0 0
        %1145 = vmatprep.subr.bf16.mxu0 0
        %1146 = vmatpush1.bf16.msra.mxu0 0
        %1147 = vmatprep.subr.bf16.mxu0 0
        %1148 = vmatpush1.bf16.msra.mxu0 0
        %1149 = vmatprep.subr.bf16.mxu0 0
        %1150 = vmatpush1.bf16.msra.mxu0 0
        %1151 = vmatprep.subr.bf16.mxu0 0
        %1152 = vmatpush1.bf16.msra.mxu0 0
        %1153 = vmatprep.subr.bf16.mxu0 0
        %1154 = vmatpush1.bf16.msra.mxu0 0
        %1155 = vmatprep.subr.bf16.mxu0 0
        %1156 = vmatpush1.bf16.msra.mxu0 0
        %1157 = vmatprep.subr.bf16.mxu0 0
        %1158 = vmatpush1.bf16.msra.mxu0 0
        %1159 = vmatprep.mubr.bf16.mxu0 0
        %1160 = vmatmul.mubr.bf16.gmra.mrb[0].mxu0 %v1122
        %v1161 = vpop.f32.mrb[0].mxu0
        %v1162 = vadd.f32 %v421, %v1161
        %v1163 = vpop.f32.mrb[0].mxu0
        %v1164 = vpop.f32.mrb[0].mxu0
        %v1165 = vadd.f32 %v421, %v1164
        %v1166 = vpop.f32.mrb[0].mxu0
        %1167 = vmatprep.mubr.bf16.mxu0 0
        %1168 = vmatmul.mubr.bf16.gmra.mrb[0].mxu0 %v1125
        %v1169 = vpop.f32.mrb[0].mxu0
        %v1170 = vadd.f32 %v421, %v1169
        %v1171 = vpop.f32.mrb[0].mxu0
        %v1172 = vpop.f32.mrb[0].mxu0
        %v1173 = vadd.f32 %v421, %v1172
        %v1174 = vpop.f32.mrb[0].mxu0
        %1175 = vdwg.mxu0
        %v1176 = vpack.c.bf16 %v1165, %v1162
        %v1177 = vpack.c.bf16 %v1173, %v1170
        %v1179 = vsel %vm592, %v1176, 0
        %v1182 = vsel %vm592, %v1177, 0
        %v1184 = vsel %vm599, %v406, 0
        %1186 = vmatprep.subr.bf16.mxu0 0
        %1187 = vmatpush1.bf16.msra.mxu0 %v1184
        %1188 = vmatprep.subr.bf16.mxu0 0
        %1189 = vmatpush1.bf16.msra.mxu0 0
        %1190 = vmatprep.subr.bf16.mxu0 0
        %1191 = vmatpush1.bf16.msra.mxu0 0
        %1192 = vmatprep.subr.bf16.mxu0 0
        %1193 = vmatpush1.bf16.msra.mxu0 0
        %1194 = vmatprep.subr.bf16.mxu0 0
        %1195 = vmatpush1.bf16.msra.mxu0 0
        %1196 = vmatprep.subr.bf16.mxu0 0
        %1197 = vmatpush1.bf16.msra.mxu0 0
        %1198 = vmatprep.subr.bf16.mxu0 0
        %1199 = vmatpush1.bf16.msra.mxu0 0
        %1200 = vmatprep.subr.bf16.mxu0 0
        %1201 = vmatpush1.bf16.msra.mxu0 0
        %1202 = vmatprep.subr.bf16.mxu0 0
        %1203 = vmatpush1.bf16.msra.mxu0 0
        %1204 = vmatprep.subr.bf16.mxu0 0
        %1205 = vmatpush1.bf16.msra.mxu0 0
        %1206 = vmatprep.subr.bf16.mxu0 0
        %1207 = vmatpush1.bf16.msra.mxu0 0
        %1208 = vmatprep.subr.bf16.mxu0 0
        %1209 = vmatpush1.bf16.msra.mxu0 0
        %1210 = vmatprep.subr.bf16.mxu0 0
        %1211 = vmatpush1.bf16.msra.mxu0 0
        %1212 = vmatprep.subr.bf16.mxu0 0
        %1213 = vmatpush1.bf16.msra.mxu0 0
        %1214 = vmatprep.subr.bf16.mxu0 0
        %1215 = vmatpush1.bf16.msra.mxu0 0
        %1216 = vmatprep.subr.bf16.mxu0 0
        %1217 = vmatpush1.bf16.msra.mxu0 0
        %1218 = vmatprep.mubr.bf16.mxu0 0
        %1219 = vmatmul.mubr.bf16.gmra.mrb[0].mxu0 %v1179
        %v1220 = vpop.f32.mrb[0].mxu0
        %v1221 = vadd.f32 0.0, %v1220
        %v1222 = vpop.f32.mrb[0].mxu0
        %v1223 = vpop.f32.mrb[0].mxu0
        %v1224 = vadd.f32 0.0, %v1223
        %v1225 = vpop.f32.mrb[0].mxu0
        %1226 = vmatprep.mubr.bf16.mxu0 0
        %1227 = vmatmul.mubr.bf16.gmra.mrb[0].mxu0 %v1182
        %v1228 = vpop.f32.mrb[0].mxu0
        %v1229 = vadd.f32 0.0, %v1228
        %v1230 = vpop.f32.mrb[0].mxu0
        %v1231 = vpop.f32.mrb[0].mxu0
        %v1232 = vadd.f32 0.0, %v1231
        %v1233 = vpop.f32.mrb[0].mxu0
        %1234 = vdwg.mxu0
        %v1235 = vtanh.pop %v1221
        %v1236 = vtanh.pop %v1224
        %v1237 = vtanh.pop %v1229
        %v1238 = vtanh.pop %v1232
        %v1239 = vpack.c.bf16 %v1236, %v1235
        %v1240 = vpack.c.bf16 %v1238, %v1237
        %v1242 = vsel %vm443, %v575, 0
        %v1245 = vsel %vm443, %v1239, 0
        %v1248 = vsel %vm443, %v1240, 0
        %1250 = vmatprep.subr.bf16.mxu0 0
        %1251 = vmatpush1.bf16.xpose.msra.mxu0 %v1245
        %1252 = vmatprep.subr.bf16.mxu0 0
        %1253 = vmatpush1.bf16.xpose.msra.mxu0 %v1248
        %1254 = vmatprep.subr.bf16.mxu0 0
        %1255 = vmatpush1.bf16.xpose.msra.mxu0 0
        %1256 = vmatprep.subr.bf16.mxu0 0
        %1257 = vmatpush1.bf16.xpose.msra.mxu0 0
        %1258 = vmatprep.subr.bf16.mxu0 0
        %1259 = vmatpush1.bf16.xpose.msra.mxu0 0
        %1260 = vmatprep.subr.bf16.mxu0 0
        %1261 = vmatpush1.bf16.xpose.msra.mxu0 0
        %1262 = vmatprep.subr.bf16.mxu0 0
        %1263 = vmatpush1.bf16.xpose.msra.mxu0 0
        %1264 = vmatprep.subr.bf16.mxu0 0
        %1265 = vmatpush1.bf16.xpose.msra.mxu0 0
        %1266 = vmatprep.subr.bf16.mxu0 0
        %1267 = vmatpush1.bf16.xpose.msra.mxu0 0
        %1268 = vmatprep.subr.bf16.mxu0 0
        %1269 = vmatpush1.bf16.xpose.msra.mxu0 0
        %1270 = vmatprep.subr.bf16.mxu0 0
        %1271 = vmatpush1.bf16.xpose.msra.mxu0 0
        %1272 = vmatprep.subr.bf16.mxu0 0
        %1273 = vmatpush1.bf16.xpose.msra.mxu0 0
        %1274 = vmatprep.subr.bf16.mxu0 0
        %1275 = vmatpush1.bf16.xpose.msra.mxu0 0
        %1276 = vmatprep.subr.bf16.mxu0 0
        %1277 = vmatpush1.bf16.xpose.msra.mxu0 0
        %1278 = vmatprep.subr.bf16.mxu0 0
        %1279 = vmatpush1.bf16.xpose.msra.mxu0 0
        %1280 = vmatprep.subr.bf16.mxu0 0
        %1281 = vmatpush1.bf16.xpose.msra.mxu0 0
        %1282 = vmatprep.mubr.bf16.mxu0 0
        %1283 = vmatmul.mubr.bf16.gmra.mrb[0].mxu0 %v1242
        %v1284 = vpop.f32.mrb[0].mxu0
        %v1285 = vadd.f32 0.0, %v1284
        %v1286 = vpop.f32.mrb[0].mxu0
        %v1287 = vpop.f32.mrb[0].mxu0
        %v1288 = vpop.f32.mrb[0].mxu0
        %1289 = vdwg.mxu0
        %v1290 = vadd.f32 %v493, %v1285
        %v1291 = vtanh.pop %v1290
        %v1293 = vsel %vm443, %v573, 0
        %1295 = vmatprep.subr.bf16.mxu0 0
        %1296 = vmatpush1.bf16.msra.mxu0 %v1239
        %1297 = vmatprep.subr.bf16.mxu0 0
        %1298 = vmatpush1.bf16.msra.mxu0 %v1240
        %1299 = vmatprep.subr.bf16.mxu0 0
        %1300 = vmatpush1.bf16.msra.mxu0 0
        %1301 = vmatprep.subr.bf16.mxu0 0
        %1302 = vmatpush1.bf16.msra.mxu0 0
        %1303 = vmatprep.subr.bf16.mxu0 0
        %1304 = vmatpush1.bf16.msra.mxu0 0
        %1305 = vmatprep.subr.bf16.mxu0 0
        %1306 = vmatpush1.bf16.msra.mxu0 0
        %1307 = vmatprep.subr.bf16.mxu0 0
        %1308 = vmatpush1.bf16.msra.mxu0 0
        %1309 = vmatprep.subr.bf16.mxu0 0
        %1310 = vmatpush1.bf16.msra.mxu0 0
        %1311 = vmatprep.subr.bf16.mxu0 0
        %1312 = vmatpush1.bf16.msra.mxu0 0
        %1313 = vmatprep.subr.bf16.mxu0 0
        %1314 = vmatpush1.bf16.msra.mxu0 0
        %1315 = vmatprep.subr.bf16.mxu0 0
        %1316 = vmatpush1.bf16.msra.mxu0 0
        %1317 = vmatprep.subr.bf16.mxu0 0
        %1318 = vmatpush1.bf16.msra.mxu0 0
        %1319 = vmatprep.subr.bf16.mxu0 0
        %1320 = vmatpush1.bf16.msra.mxu0 0
        %1321 = vmatprep.subr.bf16.mxu0 0
        %1322 = vmatpush1.bf16.msra.mxu0 0
        %1323 = vmatprep.subr.bf16.mxu0 0
        %1324 = vmatpush1.bf16.msra.mxu0 0
        %1325 = vmatprep.subr.bf16.mxu0 0
        %1326 = vmatpush1.bf16.msra.mxu0 0
        %1327 = vmatprep.mubr.bf16.mxu0 0
        %1328 = vmatmul.mubr.bf16.gmra.mrb[0].mxu0 %v1293
        %v1329 = vpop.f32.mrb[0].mxu0
        %v1330 = vadd.f32 %v566, %v1329
        %v1331 = vpop.f32.mrb[0].mxu0
        %v1332 = vpop.f32.mrb[0].mxu0
        %v1333 = vpop.f32.mrb[0].mxu0
        %1334 = vdwg.mxu0
        %v1335 = vtanh.pop %v1330
        %v1336 = vsel %vm443, %v1291, -inf
        %1337 = vmax.xlane.f32.xlu0 %v1336
        %v1338 = vpop.xlane.xlu0 %1337
        %v1339 = vsub.f32 %v1291, %v1338
        %v1340 = vmul.f32 %v1339, 1.442695
        %v1341 = vpow.pop %v1340
        %v1342 = vsel %vm443, %v1341, 0.0
        %1343 = vadd.xlane.f32.xlu0 %v1342
        %v1344 = vpop.xlane.xlu0 %1343
        %v1345 = vrcp.pop %v1344
        %v1346 = vmul.f32 %v1341, %v1345
        %v1347 = vmul.f32 %v1346, %v397
        %1348 = vst.msk [vmem:[%s372 + $0x10] sm:$0xff] %vm443, %v1347
        %v1349 = vsel %vm443, %v1335, -inf
        %1350 = vmax.xlane.f32.xlu0 %v1349
        %v1351 = vpop.xlane.xlu0 %1350
        %v1352 = vsub.f32 %v1335, %v1351
        %v1353 = vmul.f32 %v1352, 1.442695
        %v1354 = vpow.pop %v1353
        %v1355 = vsel %vm443, %v1354, 0.0
        %1356 = vadd.xlane.f32.xlu0 %v1355
        %v1357 = vpop.xlane.xlu0 %1356
        %v1358 = vrcp.pop %v1357
        %v1359 = vmul.f32 %v1354, %v1358
        %v1360 = vmul.f32 %v1359, %v401
        %1361 = vst.msk [vmem:[%s379 + $0x10] sm:$0xff] %vm443, %v1360
        %v1363 = vrot.slane %v404, 4
        %1365 = vxpose.xlu0.c.b16.start [1/8] %v1363, 128
        %1366 = vxpose.xlu0.c.b16.cont [2/8] 0, 128
        %1367 = vxpose.xlu0.c.b16.cont [3/8] 0, 128
        %1368 = vxpose.xlu0.c.b16.cont [4/8] 0, 128
        %1369 = vxpose.xlu0.c.b16.cont [5/8] 0, 128
        %1370 = vxpose.xlu0.c.b16.cont [6/8] 0, 128
        %1371 = vxpose.xlu0.c.b16.cont [7/8] 0, 128
        %1372 = vxpose.xlu0.c.b16.end [8/8] 0, 128
        %v1373 = vpop.trf.xlu0
        %v1374 = vpop.trf.xlu0
        %v1375 = vpop.trf.xlu0
        %v1376 = vpop.trf.xlu0
        %v1377 = vpop.trf.xlu0
        %v1378 = vpop.trf.xlu0
        %v1379 = vpop.trf.xlu0
        %v1380 = vpop.trf.xlu0
        %v1382 = vsel %vm592, %v1373, 0
        %v1385 = vsel %vm592, %v1374, 0
        %1387 = vmatprep.subr.bf16.mxu0 0
        %1388 = vmatpush1.bf16.msra.mxu0 %v601
        %1389 = vmatprep.subr.bf16.mxu0 0
        %1390 = vmatpush1.bf16.msra.mxu0 0
        %1391 = vmatprep.subr.bf16.mxu0 0
        %1392 = vmatpush1.bf16.msra.mxu0 0
        %1393 = vmatprep.subr.bf16.mxu0 0
        %1394 = vmatpush1.bf16.msra.mxu0 0
        %1395 = vmatprep.subr.bf16.mxu0 0
        %1396 = vmatpush1.bf16.msra.mxu0 0
        %1397 = vmatprep.subr.bf16.mxu0 0
        %1398 = vmatpush1.bf16.msra.mxu0 0
        %1399 = vmatprep.subr.bf16.mxu0 0
        %1400 = vmatpush1.bf16.msra.mxu0 0
        %1401 = vmatprep.subr.bf16.mxu0 0
        %1402 = vmatpush1.bf16.msra.mxu0 0
        %1403 = vmatprep.subr.bf16.mxu0 0
        %1404 = vmatpush1.bf16.msra.mxu0 0
        %1405 = vmatprep.subr.bf16.mxu0 0
        %1406 = vmatpush1.bf16.msra.mxu0 0
        %1407 = vmatprep.subr.bf16.mxu0 0
        %1408 = vmatpush1.bf16.msra.mxu0 0
        %1409 = vmatprep.subr.bf16.mxu0 0
        %1410 = vmatpush1.bf16.msra.mxu0 0
        %1411 = vmatprep.subr.bf16.mxu0 0
        %1412 = vmatpush1.bf16.msra.mxu0 0
        %1413 = vmatprep.subr.bf16.mxu0 0
        %1414 = vmatpush1.bf16.msra.mxu0 0
        %1415 = vmatprep.subr.bf16.mxu0 0
        %1416 = vmatpush1.bf16.msra.mxu0 0
        %1417 = vmatprep.subr.bf16.mxu0 0
        %1418 = vmatpush1.bf16.msra.mxu0 0
        %1419 = vmatprep.mubr.bf16.mxu0 0
        %1420 = vmatmul.mubr.bf16.gmra.mrb[0].mxu0 %v1382
        %v1421 = vpop.f32.mrb[0].mxu0
        %v1422 = vadd.f32 %v421, %v1421
        %v1423 = vpop.f32.mrb[0].mxu0
        %v1424 = vpop.f32.mrb[0].mxu0
        %v1425 = vadd.f32 %v421, %v1424
        %v1426 = vpop.f32.mrb[0].mxu0
        %1427 = vmatprep.mubr.bf16.mxu0 0
        %1428 = vmatmul.mubr.bf16.gmra.mrb[0].mxu0 %v1385
        %v1429 = vpop.f32.mrb[0].mxu0
        %v1430 = vadd.f32 %v421, %v1429
        %v1431 = vpop.f32.mrb[0].mxu0
        %v1432 = vpop.f32.mrb[0].mxu0
        %v1433 = vadd.f32 %v421, %v1432
        %v1434 = vpop.f32.mrb[0].mxu0
        %1435 = vdwg.mxu0
        %v1436 = vpack.c.bf16 %v1425, %v1422
        %v1437 = vpack.c.bf16 %v1433, %v1430
        %v1439 = vrot.slane %v406, 4
        %v1441 = vsel %vm592, %v1436, 0
        %v1444 = vsel %vm592, %v1437, 0
        %v1447 = vsel %vm599, %v1439, 0
        %1449 = vmatprep.subr.bf16.mxu0 0
        %1450 = vmatpush1.bf16.msra.mxu0 %v1447
        %1451 = vmatprep.subr.bf16.mxu0 0
        %1452 = vmatpush1.bf16.msra.mxu0 0
        %1453 = vmatprep.subr.bf16.mxu0 0
        %1454 = vmatpush1.bf16.msra.mxu0 0
        %1455 = vmatprep.subr.bf16.mxu0 0
        %1456 = vmatpush1.bf16.msra.mxu0 0
        %1457 = vmatprep.subr.bf16.mxu0 0
        %1458 = vmatpush1.bf16.msra.mxu0 0
        %1459 = vmatprep.subr.bf16.mxu0 0
        %1460 = vmatpush1.bf16.msra.mxu0 0
        %1461 = vmatprep.subr.bf16.mxu0 0
        %1462 = vmatpush1.bf16.msra.mxu0 0
        %1463 = vmatprep.subr.bf16.mxu0 0
        %1464 = vmatpush1.bf16.msra.mxu0 0
        %1465 = vmatprep.subr.bf16.mxu0 0
        %1466 = vmatpush1.bf16.msra.mxu0 0
        %1467 = vmatprep.subr.bf16.mxu0 0
        %1468 = vmatpush1.bf16.msra.mxu0 0
        %1469 = vmatprep.subr.bf16.mxu0 0
        %1470 = vmatpush1.bf16.msra.mxu0 0
        %1471 = vmatprep.subr.bf16.mxu0 0
        %1472 = vmatpush1.bf16.msra.mxu0 0
        %1473 = vmatprep.subr.bf16.mxu0 0
        %1474 = vmatpush1.bf16.msra.mxu0 0
        %1475 = vmatprep.subr.bf16.mxu0 0
        %1476 = vmatpush1.bf16.msra.mxu0 0
        %1477 = vmatprep.subr.bf16.mxu0 0
        %1478 = vmatpush1.bf16.msra.mxu0 0
        %1479 = vmatprep.subr.bf16.mxu0 0
        %1480 = vmatpush1.bf16.msra.mxu0 0
        %1481 = vmatprep.mubr.bf16.mxu0 0
        %1482 = vmatmul.mubr.bf16.gmra.mrb[0].mxu0 %v1441
        %v1483 = vpop.f32.mrb[0].mxu0
        %v1484 = vadd.f32 0.0, %v1483
        %v1485 = vpop.f32.mrb[0].mxu0
        %v1486 = vpop.f32.mrb[0].mxu0
        %v1487 = vadd.f32 0.0, %v1486
        %v1488 = vpop.f32.mrb[0].mxu0
        %1489 = vmatprep.mubr.bf16.mxu0 0
        %1490 = vmatmul.mubr.bf16.gmra.mrb[0].mxu0 %v1444
        %v1491 = vpop.f32.mrb[0].mxu0
        %v1492 = vadd.f32 0.0, %v1491
        %v1493 = vpop.f32.mrb[0].mxu0
        %v1494 = vpop.f32.mrb[0].mxu0
        %v1495 = vadd.f32 0.0, %v1494
        %v1496 = vpop.f32.mrb[0].mxu0
        %1497 = vdwg.mxu0
        %v1498 = vtanh.pop %v1484
        %v1499 = vtanh.pop %v1487
        %v1500 = vtanh.pop %v1492
        %v1501 = vtanh.pop %v1495
        %v1502 = vpack.c.bf16 %v1499, %v1498
        %v1503 = vpack.c.bf16 %v1501, %v1500
        %v1505 = vrot.slane %v575, 4
        %v1507 = vsel %vm443, %v1505, 0
        %v1510 = vsel %vm443, %v1502, 0
        %v1513 = vsel %vm443, %v1503, 0
        %1515 = vmatprep.subr.bf16.mxu0 0
        %1516 = vmatpush1.bf16.xpose.msra.mxu0 %v1510
        %1517 = vmatprep.subr.bf16.mxu0 0
        %1518 = vmatpush1.bf16.xpose.msra.mxu0 %v1513
        %1519 = vmatprep.subr.bf16.mxu0 0
        %1520 = vmatpush1.bf16.xpose.msra.mxu0 0
        %1521 = vmatprep.subr.bf16.mxu0 0
        %1522 = vmatpush1.bf16.xpose.msra.mxu0 0
        %1523 = vmatprep.subr.bf16.mxu0 0
        %1524 = vmatpush1.bf16.xpose.msra.mxu0 0
        %1525 = vmatprep.subr.bf16.mxu0 0
        %1526 = vmatpush1.bf16.xpose.msra.mxu0 0
        %1527 = vmatprep.subr.bf16.mxu0 0
        %1528 = vmatpush1.bf16.xpose.msra.mxu0 0
        %1529 = vmatprep.subr.bf16.mxu0 0
        %1530 = vmatpush1.bf16.xpose.msra.mxu0 0
        %1531 = vmatprep.subr.bf16.mxu0 0
        %1532 = vmatpush1.bf16.xpose.msra.mxu0 0
        %1533 = vmatprep.subr.bf16.mxu0 0
        %1534 = vmatpush1.bf16.xpose.msra.mxu0 0
        %1535 = vmatprep.subr.bf16.mxu0 0
        %1536 = vmatpush1.bf16.xpose.msra.mxu0 0
        %1537 = vmatprep.subr.bf16.mxu0 0
        %1538 = vmatpush1.bf16.xpose.msra.mxu0 0
        %1539 = vmatprep.subr.bf16.mxu0 0
        %1540 = vmatpush1.bf16.xpose.msra.mxu0 0
        %1541 = vmatprep.subr.bf16.mxu0 0
        %1542 = vmatpush1.bf16.xpose.msra.mxu0 0
        %1543 = vmatprep.subr.bf16.mxu0 0
        %1544 = vmatpush1.bf16.xpose.msra.mxu0 0
        %1545 = vmatprep.subr.bf16.mxu0 0
        %1546 = vmatpush1.bf16.xpose.msra.mxu0 0
        %1547 = vmatprep.mubr.bf16.mxu0 0
        %1548 = vmatmul.mubr.bf16.gmra.mrb[0].mxu0 %v1507
        %v1549 = vpop.f32.mrb[0].mxu0
        %v1550 = vadd.f32 0.0, %v1549
        %v1551 = vpop.f32.mrb[0].mxu0
        %v1552 = vpop.f32.mrb[0].mxu0
        %v1553 = vpop.f32.mrb[0].mxu0
        %1554 = vdwg.mxu0
        %v1555 = vadd.f32 %v496, %v1550
        %v1556 = vtanh.pop %v1555
        %v1558 = vrot.slane %v573, 4
        %v1560 = vsel %vm443, %v1558, 0
        %1562 = vmatprep.subr.bf16.mxu0 0
        %1563 = vmatpush1.bf16.msra.mxu0 %v1502
        %1564 = vmatprep.subr.bf16.mxu0 0
        %1565 = vmatpush1.bf16.msra.mxu0 %v1503
        %1566 = vmatprep.subr.bf16.mxu0 0
        %1567 = vmatpush1.bf16.msra.mxu0 0
        %1568 = vmatprep.subr.bf16.mxu0 0
        %1569 = vmatpush1.bf16.msra.mxu0 0
        %1570 = vmatprep.subr.bf16.mxu0 0
        %1571 = vmatpush1.bf16.msra.mxu0 0
        %1572 = vmatprep.subr.bf16.mxu0 0
        %1573 = vmatpush1.bf16.msra.mxu0 0
        %1574 = vmatprep.subr.bf16.mxu0 0
        %1575 = vmatpush1.bf16.msra.mxu0 0
        %1576 = vmatprep.subr.bf16.mxu0 0
        %1577 = vmatpush1.bf16.msra.mxu0 0
        %1578 = vmatprep.subr.bf16.mxu0 0
        %1579 = vmatpush1.bf16.msra.mxu0 0
        %1580 = vmatprep.subr.bf16.mxu0 0
        %1581 = vmatpush1.bf16.msra.mxu0 0
        %1582 = vmatprep.subr.bf16.mxu0 0
        %1583 = vmatpush1.bf16.msra.mxu0 0
        %1584 = vmatprep.subr.bf16.mxu0 0
        %1585 = vmatpush1.bf16.msra.mxu0 0
        %1586 = vmatprep.subr.bf16.mxu0 0
        %1587 = vmatpush1.bf16.msra.mxu0 0
        %1588 = vmatprep.subr.bf16.mxu0 0
        %1589 = vmatpush1.bf16.msra.mxu0 0
        %1590 = vmatprep.subr.bf16.mxu0 0
        %1591 = vmatpush1.bf16.msra.mxu0 0
        %1592 = vmatprep.subr.bf16.mxu0 0
        %1593 = vmatpush1.bf16.msra.mxu0 0
        %1594 = vmatprep.mubr.bf16.mxu0 0
        %1595 = vmatmul.mubr.bf16.gmra.mrb[0].mxu0 %v1560
        %v1596 = vpop.f32.mrb[0].mxu0
        %v1597 = vadd.f32 %v569, %v1596
        %v1598 = vpop.f32.mrb[0].mxu0
        %v1599 = vpop.f32.mrb[0].mxu0
        %v1600 = vpop.f32.mrb[0].mxu0
        %1601 = vdwg.mxu0
        %v1602 = vtanh.pop %v1597
        %v1603 = vsel %vm443, %v1556, -inf
        %1604 = vmax.xlane.f32.xlu0 %v1603
        %v1605 = vpop.xlane.xlu0 %1604
        %v1606 = vsub.f32 %v1556, %v1605
        %v1607 = vmul.f32 %v1606, 1.442695
        %v1608 = vpow.pop %v1607
        %v1609 = vsel %vm443, %v1608, 0.0
        %1610 = vadd.xlane.f32.xlu0 %v1609
        %v1611 = vpop.xlane.xlu0 %1610
        %v1612 = vrcp.pop %v1611
        %v1613 = vmul.f32 %v1608, %v1612
        %v1614 = vmul.f32 %v1613, %v398
        %1615 = vst.msk [vmem:[%s372 + $0x18] sm:$0xff] %vm443, %v1614
        %v1616 = vsel %vm443, %v1602, -inf
        %1617 = vmax.xlane.f32.xlu0 %v1616
        %v1618 = vpop.xlane.xlu0 %1617
        %v1619 = vsub.f32 %v1602, %v1618
        %v1620 = vmul.f32 %v1619, 1.442695
        %v1621 = vpow.pop %v1620
        %v1622 = vsel %vm443, %v1621, 0.0
        %1623 = vadd.xlane.f32.xlu0 %v1622
        %v1624 = vpop.xlane.xlu0 %1623
        %v1625 = vrcp.pop %v1624
        %v1626 = vmul.f32 %v1621, %v1625
        %v1627 = vmul.f32 %v1626, %v402
        %1628 = vst.msk [vmem:[%s379 + $0x18] sm:$0xff] %vm443, %v1627
        %s1629 = sand.u32 %s215, 1
        %s1630 = scalar_lea.sflag [#allocation4], %s1629
        %s1631 = sand.u32 %s215, 1
        %s1632 = smul.addr %s1631, 32
        %s1633 = scalar_lea.vmem [#allocation7], %s1632
        %s1634 = sand.u32 %s241, 1
        %s1635 = scalar_lea.sflag [#allocation9], %s1634
        %s1636 = sand.u32 %s241, 1
        %s1637 = smul.addr %s1636, 32
        %s1638 = scalar_lea.vmem [#allocation8], %s1637
        // Predicated region
        $region61: #{attention_module.1} parent=51 // pred_check
          %p1639 = pneg %p225
        $region62: #{attention_module.1} parent=51 // pred_check_branch
          %1641 = sbr.rel (%p1639) target = $region64
        $region63: #{attention_module.1} parent=51 // pred_region
          %s1642 = smul.u32 4, %s29
          %s1644 = ssub.s32 512, 512
          %1645 = vsyncadd %s1630, %s1644
          %s1646 = smul.addr %s1642, 128
          %s1647 = scalar_lea.hbm %s8, %s1646
          %s1648 = sshll.u32 %s1633, 4
          %s1649 = int_to_ptr.vmem [resolvable:$true] %s1648
          %1654 = dma.vmem_to_hbm [thread:$0]  %s1649, 512, %s1647, %s1630, 128, 128, 8
        $region64: #{attention_module.1} parent=51 // pred_fallthru
          _
        // Predicated region
        $region65: #{attention_module.1} parent=51 // pred_check
          %p1655 = pneg %p251
        $region66: #{attention_module.1} parent=51 // pred_check_branch
          %1657 = sbr.rel (%p1655) target = $region68
        $region67: #{attention_module.1} parent=51 // pred_region
          %s1658 = smul.u32 4, %s29
          %s1660 = ssub.s32 512, 512
          %1661 = vsyncadd %s1635, %s1660
          %s1662 = smul.addr %s1658, 128
          %s1663 = scalar_lea.hbm %s9, %s1662
          %s1664 = sshll.u32 %s1638, 4
          %s1665 = int_to_ptr.vmem [resolvable:$true] %s1664
          %1670 = dma.vmem_to_hbm [thread:$0]  %s1665, 512, %s1663, %s1635, 128, 128, 8
        $region68: #{attention_module.1} parent=51 // pred_fallthru
          _
      $region52: #{attention_module.1} parent=5 // pred_fallthru
        _
      %p1671 = scmp.le.s32.totalorder 2, %s24
      // Predicated region
      $region69: #{attention_module.1} parent=5 // pred_check
        %p1672 = pneg %p1671
      $region70: #{attention_module.1} parent=5 // pred_check_branch
        %1674 = sbr.rel (%p1672) target = $region72
      $region71: #{attention_module.1} parent=5 // pred_region
        %s1675 = ssub.s32 %s24, 2
        // Predicated region
        $region73: #{attention_module.1} parent=71 // pred_check
          %p1676 = pneg %p231
        $region74: #{attention_module.1} parent=71 // pred_check_branch
          %1678 = sbr.rel (%p1676) target = $region76
        $region75: #{attention_module.1} parent=71 // pred_region
          %s1679 = sand.u32 %s216, 1
          %s1680 = scalar_lea.sflag [#allocation4], %s1679
          %s1681 = sand.u32 %s216, 1
          %s1682 = smul.addr %s1681, 32
          %s1683 = scalar_lea.vmem [#allocation7], %s1682
          %1684 = dma.done %s1680, 512
        $region76: #{attention_module.1} parent=71 // pred_fallthru
          _
        // Predicated region
        $region77: #{attention_module.1} parent=71 // pred_check
          %p1685 = pneg %p257
        $region78: #{attention_module.1} parent=71 // pred_check_branch
          %1687 = sbr.rel (%p1685) target = $region80
        $region79: #{attention_module.1} parent=71 // pred_region
          %s1688 = sand.u32 %s242, 1
          %s1689 = scalar_lea.sflag [#allocation9], %s1688
          %s1690 = sand.u32 %s242, 1
          %s1691 = smul.addr %s1690, 32
          %s1692 = scalar_lea.vmem [#allocation8], %s1691
          %1693 = dma.done %s1689, 512
        $region80: #{attention_module.1} parent=71 // pred_fallthru
          _
      $region72: #{attention_module.1} parent=5 // pred_fallthru
        _
    $region6: #{attention_module.1} parent=1 // loop_footer
      %s28 = sadd.s32 1, %s24
    $region7: #{attention_module.1} parent=1 // loop_footer_branch
      %23 = sbr.rel target = $region3
    $region8: #{attention_module.1} parent=1 // loop_exit
      _
    %1694 = vsyncpa [#allocation3], 1
    %s1695 = scalar_lea.sflag [#allocation3], 1
    %1696 = vsyncpa %s1695, 1
    %1697 = vsyncpa [#allocation6], 1
    %1698 = vsyncpa [#allocation4], 1
    %s1699 = scalar_lea.sflag [#allocation4], 1
    %1700 = vsyncpa %s1699, 1
    %1701 = vsyncpa [#allocation9], 1
    %s1702 = scalar_lea.sflag [#allocation9], 1
    %1703 = vsyncpa %s1702, 1

</llo_original>
